<compile_context>
chip_gen: v7x
topology: tpu7x:2x2x1
jax: 0.10.0
libtpu: 0.0.40
codegen_flags: <defaults>
</compile_context>

<pallas_src>
import functools

import jax
import jax.numpy as jnp
from jax.experimental import pallas as pl
from jax.experimental.pallas import tpu as pltpu


# ----------------------------- Pallas kernels -----------------------------

def _encoder_layer_kernel(*refs, nhead, compute_guided):
    """One fully-fused encoder layer for a single batch element.

    Fused QKV proj + per-head attention + fused out-proj + residual + LN1 +
    FFN + residual + LN2, plus head-averaged attention weights and (optionally)
    the guided-attention-loss numerator partial sum.
    """
    if compute_guided:
        (x_ref, kpm_ref, gw_ref,
         wqkv_ref, bqkv_ref, wo_ref, bo_ref, g1_ref, be1_ref,
         w1_ref, b1_ref, w2_ref, b2_ref, g2_ref, be2_ref,
         y_ref, attn_ref, num_ref) = refs
    else:
        (x_ref, kpm_ref,
         wqkv_ref, bqkv_ref, wo_ref, bo_ref, g1_ref, be1_ref,
         w1_ref, b1_ref, w2_ref, b2_ref, g2_ref, be2_ref,
         y_ref, attn_ref) = refs
        gw_ref = None
        num_ref = None

    x = x_ref[0]                                     # (S, E) f32
    S, E = x.shape
    H = nhead
    Dh = E // H
    scale = 1.0 / float(Dh) ** 0.5
    x_bf = x.astype(jnp.bfloat16)

    # ---- fused QKV projection: one wide MXU matmul, f32 accumulation
    qkv = jnp.dot(x_bf, wqkv_ref[...], preferred_element_type=jnp.float32)
    qkv = qkv + bqkv_ref[...]                        # (S, 3E)

    kpm_row = kpm_ref[0]                             # (1, S) f32, 1.0 => padded key
    neg_bias = kpm_row * jnp.float32(-1e30)          # additive mask bias

    # ---- per-head scaled-dot-product attention (static unroll; H is small)
    attn_acc = jnp.zeros((S, S), jnp.float32)
    ctx_parts = []
    for h in range(H):
        q_h = qkv[:, h * Dh:(h + 1) * Dh] * scale            # (S, Dh)
        k_h = qkv[:, E + h * Dh:E + (h + 1) * Dh]            # (S, Dh)
        v_h = qkv[:, 2 * E + h * Dh:2 * E + (h + 1) * Dh]    # (S, Dh)
        # scores = q @ k^T without materializing a transpose
        s_h = jax.lax.dot_general(
            q_h.astype(jnp.bfloat16), k_h.astype(jnp.bfloat16),
            (((1,), (1,)), ((), ())), preferred_element_type=jnp.float32)  # (S, S)
        s_h = s_h + neg_bias
        s_h = s_h - jnp.max(s_h, axis=-1, keepdims=True)
        p_h = jnp.exp(s_h)                                   # f32 softmax
        # approx reciprocal: ~1e-3 rel deviation vs exact softmax (eval-mode OK)
        p_h = p_h * pl.reciprocal(jnp.sum(p_h, axis=-1, keepdims=True), approx=True)
        attn_acc = attn_acc + p_h
        ctx_parts.append(jnp.dot(p_h.astype(jnp.bfloat16), v_h.astype(jnp.bfloat16),
                                 preferred_element_type=jnp.float32))       # (S, Dh)

    # ---- fused output projection: single K=E matmul over merged heads
    ctx = jnp.concatenate(ctx_parts, axis=-1)        # (S, E)
    proj = jnp.dot(ctx.astype(jnp.bfloat16), wo_ref[...],
                   preferred_element_type=jnp.float32) + bo_ref[...]

    # ---- residual + LayerNorm1 (post-LN, matching nn.TransformerEncoderLayer)
    z1 = x + proj
    mu1 = jnp.mean(z1, axis=-1, keepdims=True)
    var1 = jnp.mean((z1 - mu1) ** 2, axis=-1, keepdims=True)
    h1 = (z1 - mu1) * jax.lax.rsqrt(var1 + 1e-5) * g1_ref[...] + be1_ref[...]

    # ---- FFN: linear1 + ReLU + linear2 (fused; no HBM round trip of h1)
    t = jnp.dot(h1.astype(jnp.bfloat16), w1_ref[...],
                preferred_element_type=jnp.float32) + b1_ref[...]
    t = jnp.maximum(t, 0.0)
    ff = jnp.dot(t.astype(jnp.bfloat16), w2_ref[...],
                 preferred_element_type=jnp.float32) + b2_ref[...]

    # ---- residual + LayerNorm2
    z2 = h1 + ff
    mu2 = jnp.mean(z2, axis=-1, keepdims=True)
    var2 = jnp.mean((z2 - mu2) ** 2, axis=-1, keepdims=True)
    y_ref[0] = (z2 - mu2) * jax.lax.rsqrt(var2 + 1e-5) * g2_ref[...] + be2_ref[...]

    # head-averaged attention weights (what PyTorch MultiheadAttention returns)
    attn = attn_acc * (1.0 / H)
    attn_ref[0] = attn

    if compute_guided:
        # gw_ref = (1 - exp(-((j-i)/len)^2 / (2 sigma^2))) * non_padding_mask,
        # precomputed once in plain JAX (layer-invariant).
        num_ref[0] = jnp.broadcast_to(jnp.sum(attn * gw_ref[0]), (1, 1))


def _ln_kernel(x_ref, g_ref, beta_ref, o_ref):
    """Plain LayerNorm over the last dim (optional final norm)."""
    x = x_ref[...]
    mu = jnp.mean(x, axis=-1, keepdims=True)
    var = jnp.mean((x - mu) ** 2, axis=-1, keepdims=True)
    o_ref[...] = (x - mu) * jax.lax.rsqrt(var + 1e-5) * g_ref[...] + beta_ref[...]


# ----------------------------- pallas_call wrappers -----------------------------

def encoder_layer(x, kpm_row, gw_masked, p, *, nhead):
    """x: (B,S,E) f32 -> (y (B,S,E), attn (B,S,S)[, num (B,1,1)]).

    `num` is only produced when gw_masked is not None (guided layers).
    """
    B, S, E = x.shape
    Fdim = p['w1'].shape[1]
    compute_guided = gw_masked is not None
    kernel = functools.partial(_encoder_layer_kernel, nhead=nhead,
                               compute_guided=compute_guided)

    c2 = lambda b: (0, 0)
    in_specs = [
        pl.BlockSpec((1, S, E), lambda b: (b, 0, 0)),       # x
        pl.BlockSpec((1, 1, S), lambda b: (b, 0, 0)),       # key-padding mask (row form)
    ]
    operands = [x, kpm_row]
    if compute_guided:
        in_specs.append(pl.BlockSpec((1, S, S), lambda b: (b, 0, 0)))   # guided weights
        operands.append(gw_masked)
    in_specs += [
        pl.BlockSpec((E, 3 * E), c2),    # w_qkv (bf16, q|k|v concatenated)
        pl.BlockSpec((1, 3 * E), c2),    # b_qkv
        pl.BlockSpec((E, E), c2),        # wo (bf16)
        pl.BlockSpec((1, E), c2),        # bo
        pl.BlockSpec((1, E), c2),        # ln1 gamma
        pl.BlockSpec((1, E), c2),        # ln1 beta
        pl.BlockSpec((E, Fdim), c2),     # w1 (bf16)
        pl.BlockSpec((1, Fdim), c2),     # b1
        pl.BlockSpec((Fdim, E), c2),     # w2 (bf16)
        pl.BlockSpec((1, E), c2),        # b2
        pl.BlockSpec((1, E), c2),        # ln2 gamma
        pl.BlockSpec((1, E), c2),        # ln2 beta
    ]
    operands += [p['w_qkv'], p['b_qkv'], p['wo'], p['bo'], p['ln1_g'], p['ln1_b'],
                 p['w1'], p['b1'], p['w2'], p['b2'], p['ln2_g'], p['ln2_b']]

    out_shape = [jax.ShapeDtypeStruct((B, S, E), jnp.float32),
                 jax.ShapeDtypeStruct((B, S, S), jnp.float32)]
    out_specs = [pl.BlockSpec((1, S, E), lambda b: (b, 0, 0)),
                 pl.BlockSpec((1, S, S), lambda b: (b, 0, 0))]
    if compute_guided:
        out_shape.append(jax.ShapeDtypeStruct((B, 1, 1), jnp.float32))
        out_specs.append(pl.BlockSpec((1, 1, 1), lambda b: (b, 0, 0)))

    return pl.pallas_call(
        kernel,
        out_shape=tuple(out_shape),
        grid=(B,),
        in_specs=in_specs,
        out_specs=tuple(out_specs),
        compiler_params=pltpu.CompilerParams(
            dimension_semantics=("parallel",),
            # headroom below v7x's 64 MiB physical per-TC VMEM
            vmem_limit_bytes=48 * 1024 * 1024),
    )(*operands)


def layernorm(x2d, gamma, beta, tm=512):
    """Final LayerNorm: (M, E) -> (M, E)."""
    M, E = x2d.shape
    tm = min(tm, M)
    return pl.pallas_call(
        _ln_kernel,
        out_shape=jax.ShapeDtypeStruct((M, E), jnp.float32),
        grid=(pl.cdiv(M, tm),),
        in_specs=[
            pl.BlockSpec((tm, E), lambda i: (i, 0)),
            pl.BlockSpec((1, E), lambda i: (0, 0)),
            pl.BlockSpec((1, E), lambda i: (0, 0)),
        ],
        out_specs=pl.BlockSpec((tm, E), lambda i: (i, 0)),
        compiler_params=pltpu.CompilerParams(dimension_semantics=("parallel",)),
    )(x2d, gamma.reshape(1, E), beta.reshape(1, E))


# ----------------------------- model glue (plain JAX) -----------------------------

def transformer_encoder(src, src_key_padding_mask, params, final_norm, *,
                        nhead, guided_sigma=0.3, guided_layers=None):
    """src: (S, B, E); src_key_padding_mask: (B, S) bool, True => padded.

    Returns (output (S, B, E), guided_loss scalar, [attn (B, S, S)] per layer).
    """
    # TODO(synk): src_mask (attn_mask) is not supported; assumed None as in ETTS usage.
    S, B, E = src.shape
    num_layers = len(params['layers'])
    guided_layers = num_layers if guided_layers is None else guided_layers
    have_mask = src_key_padding_mask is not None

    if have_mask:
        kpm_f = src_key_padding_mask.astype(jnp.float32)          # 1.0 => padded
    else:
        kpm_f = jnp.zeros((B, S), jnp.float32)
    kpm_row = kpm_f.reshape(B, 1, S)

    # Layer-invariant guided-attention weights + denominator, hoisted out of the loop.
    gw_masked = None
    den_total = None
    if have_mask:
        keep = 1.0 - kpm_f                                        # (B, S), 1.0 => valid
        length = jnp.sum(keep, axis=-1)                           # (B,)
        safe_len = jnp.maximum(length, 1.0)                       # guard all-padded rows
        ii = jnp.arange(S, dtype=jnp.float32)[:, None]            # query index i
        jj = jnp.arange(S, dtype=jnp.float32)[None, :]            # key index j
        diff = (jj - ii)[None, :, :] / safe_len[:, None, None]
        gw = 1.0 - jnp.exp(-(diff * diff) / (2.0 * guided_sigma * guided_sigma))
        mask2d = keep[:, :, None] * keep[:, None, :]              # (B, S, S)
        gw_masked = gw * mask2d
        den_total = jnp.sum(length * length)                      # count of valid (i,j)

    x = jnp.transpose(src, (1, 0, 2))                             # (B, S, E) once

    self_attns = []
    guided_loss = jnp.float32(0.0)
    for i, lp in enumerate(params['layers']):
        compute_guided = have_mask and (i < guided_layers)
        outs = encoder_layer(x, kpm_row, gw_masked if compute_guided else None,
                             lp, nhead=nhead)
        if compute_guided:
            x, attn, num = outs
            # global masked mean over all valid (i, j) positions across the batch
            guided_loss = jnp.sum(num) / den_total + guided_loss
        else:
            x, attn = outs
        self_attns.append(jax.lax.stop_gradient(attn))            # attn.detach()

    if final_norm is not None:
        x = layernorm(x.reshape(B * S, E),
                      final_norm['g'], final_norm['b']).reshape(B, S, E)

    output = jnp.transpose(x, (1, 0, 2))                          # back to (S, B, E)
    return output, guided_loss, self_attns


def init_params(key, num_layers, E, F, H):
    def w(k, shape):
        return jax.random.normal(k, shape, jnp.float32) * 0.02

    # To load PyTorch nn.TransformerEncoderLayer weights:
    #   w_qkv = in_proj_weight.T  (columns ordered [q | k | v], heads contiguous)
    #   b_qkv = in_proj_bias[None, :]
    #   wo    = out_proj.weight.T, bo = out_proj.bias[None, :]
    #   w1/w2 = linear1/2.weight.T, b1/b2 = bias[None, :]
    layers = []
    for l in range(num_layers):
        ks = jax.random.split(jax.random.fold_in(key, l), 4)
        layers.append(dict(
            w_qkv=w(ks[0], (E, 3 * E)).astype(jnp.bfloat16),
            b_qkv=jnp.zeros((1, 3 * E), jnp.float32),
            wo=w(ks[1], (E, E)).astype(jnp.bfloat16),
            bo=jnp.zeros((1, E), jnp.float32),
            w1=w(ks[2], (E, F)).astype(jnp.bfloat16),
            b1=jnp.zeros((1, F), jnp.float32),
            w2=w(ks[3], (F, E)).astype(jnp.bfloat16),
            b2=jnp.zeros((1, E), jnp.float32),
            ln1_g=jnp.ones((1, E), jnp.float32), ln1_b=jnp.zeros((1, E), jnp.float32),
            ln2_g=jnp.ones((1, E), jnp.float32), ln2_b=jnp.zeros((1, E), jnp.float32),
        ))
    final_norm = dict(g=jnp.ones((E,), jnp.float32), b=jnp.zeros((E,), jnp.float32))
    return dict(layers=layers), final_norm


if __name__ == "__main__":
    key = jax.random.PRNGKey(0)
    S, B, E, H, F = 8, 2, 32, 4, 64
    num_layers = 2

    k_src, k_par = jax.random.split(key)
    src = jax.random.normal(k_src, (S, B, E), jnp.float32)

    # key padding mask: True => padded. batch 0 full length, batch 1 has 2 padded frames.
    lengths = jnp.array([8, 6], dtype=jnp.int32)
    kpm = jnp.arange(S)[None, :] >= lengths[:, None]               # (B, S) bool

    params, final_norm = init_params(k_par, num_layers, E, F, H)

    out, g_loss, attns = transformer_encoder(
        src, kpm, params, final_norm, nhead=H, guided_sigma=0.3, guided_layers=None)

    jax.block_until_ready(out)
    jax.block_until_ready(g_loss)
    for a in attns:
        jax.block_until_ready(a)
    print("KERNEL_OK")
</pallas_src>

<mosaic_0001>
module attributes {stable_mosaic.version = 11 : i64} {
  func.func @_encoder_layer_kernel(%arg0: i32, %arg1: memref<1x8x32xf32, #tpu.memory_space<vmem>>, %arg2: memref<1x1x8xf32, #tpu.memory_space<vmem>>, %arg3: memref<1x8x8xf32, #tpu.memory_space<vmem>>, %arg4: memref<32x96xbf16, #tpu.memory_space<vmem>>, %arg5: memref<1x96xf32, #tpu.memory_space<vmem>>, %arg6: memref<32x32xbf16, #tpu.memory_space<vmem>>, %arg7: memref<1x32xf32, #tpu.memory_space<vmem>>, %arg8: memref<1x32xf32, #tpu.memory_space<vmem>>, %arg9: memref<1x32xf32, #tpu.memory_space<vmem>>, %arg10: memref<32x64xbf16, #tpu.memory_space<vmem>>, %arg11: memref<1x64xf32, #tpu.memory_space<vmem>>, %arg12: memref<64x32xbf16, #tpu.memory_space<vmem>>, %arg13: memref<1x32xf32, #tpu.memory_space<vmem>>, %arg14: memref<1x32xf32, #tpu.memory_space<vmem>>, %arg15: memref<1x32xf32, #tpu.memory_space<vmem>>, %arg16: memref<1x8x32xf32, #tpu.memory_space<vmem>>, %arg17: memref<1x8x8xf32, #tpu.memory_space<vmem>>, %arg18: memref<1x1x1xf32, #tpu.memory_space<vmem>>) attributes {dimension_semantics = [#tpu.dimension_semantics<parallel>], iteration_bounds = array<i64: 2>, scalar_prefetch = 0 : i64, scratch_operands = 0 : i64, tpu.core_type = #tpu.core_type<tc>, window_params = [{transform_indices = @transform_0, window_bounds = array<i64: 1, 8, 32>}, {transform_indices = @transform_1, window_bounds = array<i64: 1, 1, 8>}, {transform_indices = @transform_2, window_bounds = array<i64: 1, 8, 8>}, {pipeline_mode = #tpu.pipeline_mode<synchronous>, transform_indices = @transform_3, window_bounds = array<i64: 32, 96>}, {pipeline_mode = #tpu.pipeline_mode<synchronous>, transform_indices = @transform_4, window_bounds = array<i64: 1, 96>}, {pipeline_mode = #tpu.pipeline_mode<synchronous>, transform_indices = @transform_5, window_bounds = array<i64: 32, 32>}, {pipeline_mode = #tpu.pipeline_mode<synchronous>, transform_indices = @transform_6, window_bounds = array<i64: 1, 32>}, {pipeline_mode = #tpu.pipeline_mode<synchronous>, transform_indices = @transform_7, window_bounds = array<i64: 1, 32>}, {pipeline_mode = #tpu.pipeline_mode<synchronous>, transform_indices = @transform_8, window_bounds = array<i64: 1, 32>}, {pipeline_mode = #tpu.pipeline_mode<synchronous>, transform_indices = @transform_9, window_bounds = array<i64: 32, 64>}, {pipeline_mode = #tpu.pipeline_mode<synchronous>, transform_indices = @transform_10, window_bounds = array<i64: 1, 64>}, {pipeline_mode = #tpu.pipeline_mode<synchronous>, transform_indices = @transform_11, window_bounds = array<i64: 64, 32>}, {pipeline_mode = #tpu.pipeline_mode<synchronous>, transform_indices = @transform_12, window_bounds = array<i64: 1, 32>}, {pipeline_mode = #tpu.pipeline_mode<synchronous>, transform_indices = @transform_13, window_bounds = array<i64: 1, 32>}, {pipeline_mode = #tpu.pipeline_mode<synchronous>, transform_indices = @transform_14, window_bounds = array<i64: 1, 32>}, {transform_indices = @transform_15, window_bounds = array<i64: 1, 8, 32>}, {transform_indices = @transform_16, window_bounds = array<i64: 1, 8, 8>}, {transform_indices = @transform_17, window_bounds = array<i64: 1, 1, 1>}]} {
    %c0 = arith.constant 0 : index
    %c0_0 = arith.constant 0 : index
    %c0_1 = arith.constant 0 : index
    %0 = vector.load %arg1[%c0, %c0_0, %c0_1] : memref<1x8x32xf32, #tpu.memory_space<vmem>>, vector<1x8x32xf32>
    %1 = vector.shape_cast %0 : vector<1x8x32xf32> to vector<8x32xf32>
    %2 = arith.truncf %1 : vector<8x32xf32> to vector<8x32xbf16>
    %c0_2 = arith.constant 0 : index
    %c0_3 = arith.constant 0 : index
    %3 = vector.load %arg4[%c0_2, %c0_3] : memref<32x96xbf16, #tpu.memory_space<vmem>>, vector<32x96xbf16>
    %cst = arith.constant dense<0.000000e+00> : vector<8x96xf32>
    %4 = tpu.matmul %2, %3, %cst {dimension_numbers = #tpu.dot_dimension_numbers<[1], [0], [0], [1], [0, 0, 1, 1], [], []>} : vector<8x32xbf16>, vector<32x96xbf16>, vector<8x96xf32> -> vector<8x96xf32>
    %c0_4 = arith.constant 0 : index
    %c0_5 = arith.constant 0 : index
    %5 = vector.load %arg5[%c0_4, %c0_5] : memref<1x96xf32, #tpu.memory_space<vmem>>, vector<1x96xf32>
    %6 = vector.broadcast %5 : vector<1x96xf32> to vector<8x96xf32>
    %7 = arith.addf %4, %6 : vector<8x96xf32>
    %c0_6 = arith.constant 0 : index
    %c0_7 = arith.constant 0 : index
    %c0_8 = arith.constant 0 : index
    %8 = vector.load %arg2[%c0_6, %c0_7, %c0_8] : memref<1x1x8xf32, #tpu.memory_space<vmem>>, vector<1x1x8xf32>
    %9 = vector.shape_cast %8 : vector<1x1x8xf32> to vector<1x8xf32>
    %cst_9 = arith.constant -1.000000e+30 : f32
    %10 = vector.broadcast %cst_9 : f32 to vector<1x8xf32>
    %11 = arith.mulf %9, %10 : vector<1x8xf32>
    %cst_10 = arith.constant 0.000000e+00 : f32
    %12 = vector.broadcast %cst_10 : f32 to vector<8x8xf32>
    %13 = vector.extract_strided_slice %7 {offsets = [0, 0], sizes = [8, 8], strides = [1, 1]} : vector<8x96xf32> to vector<8x8xf32>
    %cst_11 = arith.constant 0.353553385 : f32
    %14 = vector.broadcast %cst_11 : f32 to vector<8x8xf32>
    %15 = arith.mulf %13, %14 : vector<8x8xf32>
    %16 = vector.extract_strided_slice %7 {offsets = [0, 32], sizes = [8, 8], strides = [1, 1]} : vector<8x96xf32> to vector<8x8xf32>
    %17 = vector.extract_strided_slice %7 {offsets = [0, 64], sizes = [8, 8], strides = [1, 1]} : vector<8x96xf32> to vector<8x8xf32>
    %18 = arith.truncf %15 : vector<8x8xf32> to vector<8x8xbf16>
    %19 = arith.truncf %16 : vector<8x8xf32> to vector<8x8xbf16>
    %cst_12 = arith.constant dense<0.000000e+00> : vector<8x8xf32>
    %20 = tpu.matmul %18, %19, %cst_12 {dimension_numbers = #tpu.dot_dimension_numbers<[1], [1], [0], [0], [0, 0, 1, 0], [], []>} : vector<8x8xbf16>, vector<8x8xbf16>, vector<8x8xf32> -> vector<8x8xf32>
    %21 = vector.broadcast %11 : vector<1x8xf32> to vector<8x8xf32>
    %22 = arith.addf %20, %21 : vector<8x8xf32>
    %cst_13 = arith.constant dense<0xFF800000> : vector<8xf32>
    %23 = vector.multi_reduction <maximumf>, %22, %cst_13 [1] : vector<8x8xf32> to vector<8xf32>
    %24 = vector.shape_cast %23 : vector<8xf32> to vector<8x1xf32>
    %25 = vector.broadcast %24 : vector<8x1xf32> to vector<8x8xf32>
    %26 = arith.subf %22, %25 : vector<8x8xf32>
    %27 = math.exp %26 : vector<8x8xf32>
    %cst_14 = arith.constant dense<0.000000e+00> : vector<8xf32>
    %28 = vector.multi_reduction <add>, %27, %cst_14 [1] : vector<8x8xf32> to vector<8xf32>
    %29 = vector.shape_cast %28 : vector<8xf32> to vector<8x1xf32>
    %30 = tpu.reciprocal %29 {approx = true} : vector<8x1xf32> -> vector<8x1xf32>
    %31 = vector.broadcast %30 : vector<8x1xf32> to vector<8x8xf32>
    %32 = arith.mulf %27, %31 : vector<8x8xf32>
    %33 = arith.addf %12, %32 : vector<8x8xf32>
    %34 = arith.truncf %32 : vector<8x8xf32> to vector<8x8xbf16>
    %35 = arith.truncf %17 : vector<8x8xf32> to vector<8x8xbf16>
    %cst_15 = arith.constant dense<0.000000e+00> : vector<8x8xf32>
    %36 = tpu.matmul %34, %35, %cst_15 {dimension_numbers = #tpu.dot_dimension_numbers<[1], [0], [0], [1], [0, 0, 1, 1], [], []>} : vector<8x8xbf16>, vector<8x8xbf16>, vector<8x8xf32> -> vector<8x8xf32>
    %37 = vector.extract_strided_slice %7 {offsets = [0, 8], sizes = [8, 8], strides = [1, 1]} : vector<8x96xf32> to vector<8x8xf32>
    %cst_16 = arith.constant 0.353553385 : f32
    %38 = vector.broadcast %cst_16 : f32 to vector<8x8xf32>
    %39 = arith.mulf %37, %38 : vector<8x8xf32>
    %40 = vector.extract_strided_slice %7 {offsets = [0, 40], sizes = [8, 8], strides = [1, 1]} : vector<8x96xf32> to vector<8x8xf32>
    %41 = vector.extract_strided_slice %7 {offsets = [0, 72], sizes = [8, 8], strides = [1, 1]} : vector<8x96xf32> to vector<8x8xf32>
    %42 = arith.truncf %39 : vector<8x8xf32> to vector<8x8xbf16>
    %43 = arith.truncf %40 : vector<8x8xf32> to vector<8x8xbf16>
    %cst_17 = arith.constant dense<0.000000e+00> : vector<8x8xf32>
    %44 = tpu.matmul %42, %43, %cst_17 {dimension_numbers = #tpu.dot_dimension_numbers<[1], [1], [0], [0], [0, 0, 1, 0], [], []>} : vector<8x8xbf16>, vector<8x8xbf16>, vector<8x8xf32> -> vector<8x8xf32>
    %45 = vector.broadcast %11 : vector<1x8xf32> to vector<8x8xf32>
    %46 = arith.addf %44, %45 : vector<8x8xf32>
    %cst_18 = arith.constant dense<0xFF800000> : vector<8xf32>
    %47 = vector.multi_reduction <maximumf>, %46, %cst_18 [1] : vector<8x8xf32> to vector<8xf32>
    %48 = vector.shape_cast %47 : vector<8xf32> to vector<8x1xf32>
    %49 = vector.broadcast %48 : vector<8x1xf32> to vector<8x8xf32>
    %50 = arith.subf %46, %49 : vector<8x8xf32>
    %51 = math.exp %50 : vector<8x8xf32>
    %cst_19 = arith.constant dense<0.000000e+00> : vector<8xf32>
    %52 = vector.multi_reduction <add>, %51, %cst_19 [1] : vector<8x8xf32> to vector<8xf32>
    %53 = vector.shape_cast %52 : vector<8xf32> to vector<8x1xf32>
    %54 = tpu.reciprocal %53 {approx = true} : vector<8x1xf32> -> vector<8x1xf32>
    %55 = vector.broadcast %54 : vector<8x1xf32> to vector<8x8xf32>
    %56 = arith.mulf %51, %55 : vector<8x8xf32>
    %57 = arith.addf %33, %56 : vector<8x8xf32>
    %58 = arith.truncf %56 : vector<8x8xf32> to vector<8x8xbf16>
    %59 = arith.truncf %41 : vector<8x8xf32> to vector<8x8xbf16>
    %cst_20 = arith.constant dense<0.000000e+00> : vector<8x8xf32>
    %60 = tpu.matmul %58, %59, %cst_20 {dimension_numbers = #tpu.dot_dimension_numbers<[1], [0], [0], [1], [0, 0, 1, 1], [], []>} : vector<8x8xbf16>, vector<8x8xbf16>, vector<8x8xf32> -> vector<8x8xf32>
    %61 = vector.extract_strided_slice %7 {offsets = [0, 16], sizes = [8, 8], strides = [1, 1]} : vector<8x96xf32> to vector<8x8xf32>
    %cst_21 = arith.constant 0.353553385 : f32
    %62 = vector.broadcast %cst_21 : f32 to vector<8x8xf32>
    %63 = arith.mulf %61, %62 : vector<8x8xf32>
    %64 = vector.extract_strided_slice %7 {offsets = [0, 48], sizes = [8, 8], strides = [1, 1]} : vector<8x96xf32> to vector<8x8xf32>
    %65 = vector.extract_strided_slice %7 {offsets = [0, 80], sizes = [8, 8], strides = [1, 1]} : vector<8x96xf32> to vector<8x8xf32>
    %66 = arith.truncf %63 : vector<8x8xf32> to vector<8x8xbf16>
    %67 = arith.truncf %64 : vector<8x8xf32> to vector<8x8xbf16>
    %cst_22 = arith.constant dense<0.000000e+00> : vector<8x8xf32>
    %68 = tpu.matmul %66, %67, %cst_22 {dimension_numbers = #tpu.dot_dimension_numbers<[1], [1], [0], [0], [0, 0, 1, 0], [], []>} : vector<8x8xbf16>, vector<8x8xbf16>, vector<8x8xf32> -> vector<8x8xf32>
    %69 = vector.broadcast %11 : vector<1x8xf32> to vector<8x8xf32>
    %70 = arith.addf %68, %69 : vector<8x8xf32>
    %cst_23 = arith.constant dense<0xFF800000> : vector<8xf32>
    %71 = vector.multi_reduction <maximumf>, %70, %cst_23 [1] : vector<8x8xf32> to vector<8xf32>
    %72 = vector.shape_cast %71 : vector<8xf32> to vector<8x1xf32>
    %73 = vector.broadcast %72 : vector<8x1xf32> to vector<8x8xf32>
    %74 = arith.subf %70, %73 : vector<8x8xf32>
    %75 = math.exp %74 : vector<8x8xf32>
    %cst_24 = arith.constant dense<0.000000e+00> : vector<8xf32>
    %76 = vector.multi_reduction <add>, %75, %cst_24 [1] : vector<8x8xf32> to vector<8xf32>
    %77 = vector.shape_cast %76 : vector<8xf32> to vector<8x1xf32>
    %78 = tpu.reciprocal %77 {approx = true} : vector<8x1xf32> -> vector<8x1xf32>
    %79 = vector.broadcast %78 : vector<8x1xf32> to vector<8x8xf32>
    %80 = arith.mulf %75, %79 : vector<8x8xf32>
    %81 = arith.addf %57, %80 : vector<8x8xf32>
    %82 = arith.truncf %80 : vector<8x8xf32> to vector<8x8xbf16>
    %83 = arith.truncf %65 : vector<8x8xf32> to vector<8x8xbf16>
    %cst_25 = arith.constant dense<0.000000e+00> : vector<8x8xf32>
    %84 = tpu.matmul %82, %83, %cst_25 {dimension_numbers = #tpu.dot_dimension_numbers<[1], [0], [0], [1], [0, 0, 1, 1], [], []>} : vector<8x8xbf16>, vector<8x8xbf16>, vector<8x8xf32> -> vector<8x8xf32>
    %85 = vector.extract_strided_slice %7 {offsets = [0, 24], sizes = [8, 8], strides = [1, 1]} : vector<8x96xf32> to vector<8x8xf32>
    %cst_26 = arith.constant 0.353553385 : f32
    %86 = vector.broadcast %cst_26 : f32 to vector<8x8xf32>
    %87 = arith.mulf %85, %86 : vector<8x8xf32>
    %88 = vector.extract_strided_slice %7 {offsets = [0, 56], sizes = [8, 8], strides = [1, 1]} : vector<8x96xf32> to vector<8x8xf32>
    %89 = vector.extract_strided_slice %7 {offsets = [0, 88], sizes = [8, 8], strides = [1, 1]} : vector<8x96xf32> to vector<8x8xf32>
    %90 = arith.truncf %87 : vector<8x8xf32> to vector<8x8xbf16>
    %91 = arith.truncf %88 : vector<8x8xf32> to vector<8x8xbf16>
    %cst_27 = arith.constant dense<0.000000e+00> : vector<8x8xf32>
    %92 = tpu.matmul %90, %91, %cst_27 {dimension_numbers = #tpu.dot_dimension_numbers<[1], [1], [0], [0], [0, 0, 1, 0], [], []>} : vector<8x8xbf16>, vector<8x8xbf16>, vector<8x8xf32> -> vector<8x8xf32>
    %93 = vector.broadcast %11 : vector<1x8xf32> to vector<8x8xf32>
    %94 = arith.addf %92, %93 : vector<8x8xf32>
    %cst_28 = arith.constant dense<0xFF800000> : vector<8xf32>
    %95 = vector.multi_reduction <maximumf>, %94, %cst_28 [1] : vector<8x8xf32> to vector<8xf32>
    %96 = vector.shape_cast %95 : vector<8xf32> to vector<8x1xf32>
    %97 = vector.broadcast %96 : vector<8x1xf32> to vector<8x8xf32>
    %98 = arith.subf %94, %97 : vector<8x8xf32>
    %99 = math.exp %98 : vector<8x8xf32>
    %cst_29 = arith.constant dense<0.000000e+00> : vector<8xf32>
    %100 = vector.multi_reduction <add>, %99, %cst_29 [1] : vector<8x8xf32> to vector<8xf32>
    %101 = vector.shape_cast %100 : vector<8xf32> to vector<8x1xf32>
    %102 = tpu.reciprocal %101 {approx = true} : vector<8x1xf32> -> vector<8x1xf32>
    %103 = vector.broadcast %102 : vector<8x1xf32> to vector<8x8xf32>
    %104 = arith.mulf %99, %103 : vector<8x8xf32>
    %105 = arith.addf %81, %104 : vector<8x8xf32>
    %106 = arith.truncf %104 : vector<8x8xf32> to vector<8x8xbf16>
    %107 = arith.truncf %89 : vector<8x8xf32> to vector<8x8xbf16>
    %cst_30 = arith.constant dense<0.000000e+00> : vector<8x8xf32>
    %108 = tpu.matmul %106, %107, %cst_30 {dimension_numbers = #tpu.dot_dimension_numbers<[1], [0], [0], [1], [0, 0, 1, 1], [], []>} : vector<8x8xbf16>, vector<8x8xbf16>, vector<8x8xf32> -> vector<8x8xf32>
    %109 = tpu.concatenate %36, %60, %84, %108 in 1 : vector<8x8xf32>, vector<8x8xf32>, vector<8x8xf32>, vector<8x8xf32> -> vector<8x32xf32>
    %110 = arith.truncf %109 : vector<8x32xf32> to vector<8x32xbf16>
    %c0_31 = arith.constant 0 : index
    %c0_32 = arith.constant 0 : index
    %111 = vector.load %arg6[%c0_31, %c0_32] : memref<32x32xbf16, #tpu.memory_space<vmem>>, vector<32x32xbf16>
    %cst_33 = arith.constant dense<0.000000e+00> : vector<8x32xf32>
    %112 = tpu.matmul %110, %111, %cst_33 {dimension_numbers = #tpu.dot_dimension_numbers<[1], [0], [0], [1], [0, 0, 1, 1], [], []>} : vector<8x32xbf16>, vector<32x32xbf16>, vector<8x32xf32> -> vector<8x32xf32>
    %c0_34 = arith.constant 0 : index
    %c0_35 = arith.constant 0 : index
    %113 = vector.load %arg7[%c0_34, %c0_35] : memref<1x32xf32, #tpu.memory_space<vmem>>, vector<1x32xf32>
    %114 = vector.broadcast %113 : vector<1x32xf32> to vector<8x32xf32>
    %115 = arith.addf %112, %114 : vector<8x32xf32>
    %116 = arith.addf %1, %115 : vector<8x32xf32>
    %cst_36 = arith.constant dense<0.000000e+00> : vector<8xf32>
    %117 = vector.multi_reduction <add>, %116, %cst_36 [1] : vector<8x32xf32> to vector<8xf32>
    %118 = vector.shape_cast %117 : vector<8xf32> to vector<8x1xf32>
    %cst_37 = arith.constant 3.200000e+01 : f32
    %119 = vector.broadcast %cst_37 : f32 to vector<8x1xf32>
    %120 = arith.divf %118, %119 : vector<8x1xf32>
    %121 = vector.broadcast %120 : vector<8x1xf32> to vector<8x32xf32>
    %122 = arith.subf %116, %121 : vector<8x32xf32>
    %123 = arith.mulf %122, %122 : vector<8x32xf32>
    %cst_38 = arith.constant dense<0.000000e+00> : vector<8xf32>
    %124 = vector.multi_reduction <add>, %123, %cst_38 [1] : vector<8x32xf32> to vector<8xf32>
    %125 = vector.shape_cast %124 : vector<8xf32> to vector<8x1xf32>
    %cst_39 = arith.constant 3.200000e+01 : f32
    %126 = vector.broadcast %cst_39 : f32 to vector<8x1xf32>
    %127 = arith.divf %125, %126 : vector<8x1xf32>
    %128 = vector.broadcast %120 : vector<8x1xf32> to vector<8x32xf32>
    %129 = arith.subf %116, %128 : vector<8x32xf32>
    %cst_40 = arith.constant 9.99999974E-6 : f32
    %130 = vector.broadcast %cst_40 : f32 to vector<8x1xf32>
    %131 = arith.addf %127, %130 : vector<8x1xf32>
    %132 = math.rsqrt %131 : vector<8x1xf32>
    %133 = vector.broadcast %132 : vector<8x1xf32> to vector<8x32xf32>
    %134 = arith.mulf %129, %133 : vector<8x32xf32>
    %c0_41 = arith.constant 0 : index
    %c0_42 = arith.constant 0 : index
    %135 = vector.load %arg8[%c0_41, %c0_42] : memref<1x32xf32, #tpu.memory_space<vmem>>, vector<1x32xf32>
    %136 = vector.broadcast %135 : vector<1x32xf32> to vector<8x32xf32>
    %137 = arith.mulf %134, %136 : vector<8x32xf32>
    %c0_43 = arith.constant 0 : index
    %c0_44 = arith.constant 0 : index
    %138 = vector.load %arg9[%c0_43, %c0_44] : memref<1x32xf32, #tpu.memory_space<vmem>>, vector<1x32xf32>
    %139 = vector.broadcast %138 : vector<1x32xf32> to vector<8x32xf32>
    %140 = arith.addf %137, %139 : vector<8x32xf32>
    %141 = arith.truncf %140 : vector<8x32xf32> to vector<8x32xbf16>
    %c0_45 = arith.constant 0 : index
    %c0_46 = arith.constant 0 : index
    %142 = vector.load %arg10[%c0_45, %c0_46] : memref<32x64xbf16, #tpu.memory_space<vmem>>, vector<32x64xbf16>
    %cst_47 = arith.constant dense<0.000000e+00> : vector<8x64xf32>
    %143 = tpu.matmul %141, %142, %cst_47 {dimension_numbers = #tpu.dot_dimension_numbers<[1], [0], [0], [1], [0, 0, 1, 1], [], []>} : vector<8x32xbf16>, vector<32x64xbf16>, vector<8x64xf32> -> vector<8x64xf32>
    %c0_48 = arith.constant 0 : index
    %c0_49 = arith.constant 0 : index
    %144 = vector.load %arg11[%c0_48, %c0_49] : memref<1x64xf32, #tpu.memory_space<vmem>>, vector<1x64xf32>
    %145 = vector.broadcast %144 : vector<1x64xf32> to vector<8x64xf32>
    %146 = arith.addf %143, %145 : vector<8x64xf32>
    %cst_50 = arith.constant 0.000000e+00 : f32
    %147 = vector.broadcast %cst_50 : f32 to vector<8x64xf32>
    %148 = arith.maximumf %146, %147 : vector<8x64xf32>
    %149 = arith.truncf %148 : vector<8x64xf32> to vector<8x64xbf16>
    %c0_51 = arith.constant 0 : index
    %c0_52 = arith.constant 0 : index
    %150 = vector.load %arg12[%c0_51, %c0_52] : memref<64x32xbf16, #tpu.memory_space<vmem>>, vector<64x32xbf16>
    %cst_53 = arith.constant dense<0.000000e+00> : vector<8x32xf32>
    %151 = tpu.matmul %149, %150, %cst_53 {dimension_numbers = #tpu.dot_dimension_numbers<[1], [0], [0], [1], [0, 0, 1, 1], [], []>} : vector<8x64xbf16>, vector<64x32xbf16>, vector<8x32xf32> -> vector<8x32xf32>
    %c0_54 = arith.constant 0 : index
    %c0_55 = arith.constant 0 : index
    %152 = vector.load %arg13[%c0_54, %c0_55] : memref<1x32xf32, #tpu.memory_space<vmem>>, vector<1x32xf32>
    %153 = vector.broadcast %152 : vector<1x32xf32> to vector<8x32xf32>
    %154 = arith.addf %151, %153 : vector<8x32xf32>
    %155 = arith.addf %140, %154 : vector<8x32xf32>
    %cst_56 = arith.constant dense<0.000000e+00> : vector<8xf32>
    %156 = vector.multi_reduction <add>, %155, %cst_56 [1] : vector<8x32xf32> to vector<8xf32>
    %157 = vector.shape_cast %156 : vector<8xf32> to vector<8x1xf32>
    %cst_57 = arith.constant 3.200000e+01 : f32
    %158 = vector.broadcast %cst_57 : f32 to vector<8x1xf32>
    %159 = arith.divf %157, %158 : vector<8x1xf32>
    %160 = vector.broadcast %159 : vector<8x1xf32> to vector<8x32xf32>
    %161 = arith.subf %155, %160 : vector<8x32xf32>
    %162 = arith.mulf %161, %161 : vector<8x32xf32>
    %cst_58 = arith.constant dense<0.000000e+00> : vector<8xf32>
    %163 = vector.multi_reduction <add>, %162, %cst_58 [1] : vector<8x32xf32> to vector<8xf32>
    %164 = vector.shape_cast %163 : vector<8xf32> to vector<8x1xf32>
    %cst_59 = arith.constant 3.200000e+01 : f32
    %165 = vector.broadcast %cst_59 : f32 to vector<8x1xf32>
    %166 = arith.divf %164, %165 : vector<8x1xf32>
    %167 = vector.broadcast %159 : vector<8x1xf32> to vector<8x32xf32>
    %168 = arith.subf %155, %167 : vector<8x32xf32>
    %cst_60 = arith.constant 9.99999974E-6 : f32
    %169 = vector.broadcast %cst_60 : f32 to vector<8x1xf32>
    %170 = arith.addf %166, %169 : vector<8x1xf32>
    %171 = math.rsqrt %170 : vector<8x1xf32>
    %172 = vector.broadcast %171 : vector<8x1xf32> to vector<8x32xf32>
    %173 = arith.mulf %168, %172 : vector<8x32xf32>
    %c0_61 = arith.constant 0 : index
    %c0_62 = arith.constant 0 : index
    %174 = vector.load %arg14[%c0_61, %c0_62] : memref<1x32xf32, #tpu.memory_space<vmem>>, vector<1x32xf32>
    %175 = vector.broadcast %174 : vector<1x32xf32> to vector<8x32xf32>
    %176 = arith.mulf %173, %175 : vector<8x32xf32>
    %c0_63 = arith.constant 0 : index
    %c0_64 = arith.constant 0 : index
    %177 = vector.load %arg15[%c0_63, %c0_64] : memref<1x32xf32, #tpu.memory_space<vmem>>, vector<1x32xf32>
    %178 = vector.broadcast %177 : vector<1x32xf32> to vector<8x32xf32>
    %179 = arith.addf %176, %178 : vector<8x32xf32>
    %c0_65 = arith.constant 0 : index
    %c0_66 = arith.constant 0 : index
    %c0_67 = arith.constant 0 : index
    %180 = vector.load %arg16[%c0_65, %c0_66, %c0_67] : memref<1x8x32xf32, #tpu.memory_space<vmem>>, vector<1x8x32xf32>
    %181 = vector.shape_cast %180 : vector<1x8x32xf32> to vector<8x32xf32>
    %182 = vector.shape_cast %179 : vector<8x32xf32> to vector<1x8x32xf32>
    tpu.vector_store %arg16[%c0_65, %c0_66, %c0_67], %182 {strides = array<i32>} : memref<1x8x32xf32, #tpu.memory_space<vmem>>, vector<1x8x32xf32>,
    %cst_68 = arith.constant 2.500000e-01 : f32
    %183 = vector.broadcast %cst_68 : f32 to vector<8x8xf32>
    %184 = arith.mulf %105, %183 : vector<8x8xf32>
    %c0_69 = arith.constant 0 : index
    %c0_70 = arith.constant 0 : index
    %c0_71 = arith.constant 0 : index
    %185 = vector.load %arg17[%c0_69, %c0_70, %c0_71] : memref<1x8x8xf32, #tpu.memory_space<vmem>>, vector<1x8x8xf32>
    %186 = vector.shape_cast %185 : vector<1x8x8xf32> to vector<8x8xf32>
    %187 = vector.shape_cast %184 : vector<8x8xf32> to vector<1x8x8xf32>
    tpu.vector_store %arg17[%c0_69, %c0_70, %c0_71], %187 {strides = array<i32>} : memref<1x8x8xf32, #tpu.memory_space<vmem>>, vector<1x8x8xf32>,
    %c0_72 = arith.constant 0 : index
    %c0_73 = arith.constant 0 : index
    %c0_74 = arith.constant 0 : index
    %188 = vector.load %arg3[%c0_72, %c0_73, %c0_74] : memref<1x8x8xf32, #tpu.memory_space<vmem>>, vector<1x8x8xf32>
    %189 = vector.shape_cast %188 : vector<1x8x8xf32> to vector<8x8xf32>
    %190 = arith.mulf %184, %189 : vector<8x8xf32>
    %191 = vector.shape_cast %190 : vector<8x8xf32> to vector<1x8x8xf32>
    %cst_75 = arith.constant dense<0.000000e+00> : vector<1xf32>
    %192 = vector.multi_reduction <add>, %191, %cst_75 [1, 2] : vector<1x8x8xf32> to vector<1xf32>
    %193 = vector.shape_cast %192 : vector<1xf32> to vector<1x1x1xf32>
    %194 = vector.extract %193[0, 0, 0] : f32 from vector<1x1x1xf32>
    %195 = vector.broadcast %194 : f32 to vector<1x1xf32>
    %c0_76 = arith.constant 0 : index
    %c0_77 = arith.constant 0 : index
    %c0_78 = arith.constant 0 : index
    %196 = vector.load %arg18[%c0_76, %c0_77, %c0_78] : memref<1x1x1xf32, #tpu.memory_space<vmem>>, vector<1x1x1xf32>
    %197 = vector.shape_cast %196 : vector<1x1x1xf32> to vector<1x1xf32>
    %198 = vector.shape_cast %195 : vector<1x1xf32> to vector<1x1x1xf32>
    tpu.vector_store %arg18[%c0_76, %c0_77, %c0_78], %198 {strides = array<i32>} : memref<1x1x1xf32, #tpu.memory_space<vmem>>, vector<1x1x1xf32>,
    return
  }
  func.func @transform_0(%arg0: i32) -> (i32, i32, i32) {
    %c0_i32 = arith.constant 0 : i32
    %c0_i32_0 = arith.constant 0 : i32
    %c0_i32_1 = arith.constant 0 : i32
    return %arg0, %c0_i32, %c0_i32_0 : i32, i32, i32
  }
  func.func @transform_1(%arg0: i32) -> (i32, i32, i32) {
    %c0_i32 = arith.constant 0 : i32
    %c0_i32_0 = arith.constant 0 : i32
    %c0_i32_1 = arith.constant 0 : i32
    return %arg0, %c0_i32, %c0_i32_0 : i32, i32, i32
  }
  func.func @transform_2(%arg0: i32) -> (i32, i32, i32) {
    %c0_i32 = arith.constant 0 : i32
    %c0_i32_0 = arith.constant 0 : i32
    %c0_i32_1 = arith.constant 0 : i32
    return %arg0, %c0_i32, %c0_i32_0 : i32, i32, i32
  }
  func.func @transform_3(%arg0: i32) -> (i32, i32) {
    %c0_i32 = arith.constant 0 : i32
    %c0_i32_0 = arith.constant 0 : i32
    %c0_i32_1 = arith.constant 0 : i32
    return %c0_i32, %c0_i32_0 : i32, i32
  }
  func.func @transform_4(%arg0: i32) -> (i32, i32) {
    %c0_i32 = arith.constant 0 : i32
    %c0_i32_0 = arith.constant 0 : i32
    %c0_i32_1 = arith.constant 0 : i32
    return %c0_i32, %c0_i32_0 : i32, i32
  }
  func.func @transform_5(%arg0: i32) -> (i32, i32) {
    %c0_i32 = arith.constant 0 : i32
    %c0_i32_0 = arith.constant 0 : i32
    %c0_i32_1 = arith.constant 0 : i32
    return %c0_i32, %c0_i32_0 : i32, i32
  }
  func.func @transform_6(%arg0: i32) -> (i32, i32) {
    %c0_i32 = arith.constant 0 : i32
    %c0_i32_0 = arith.constant 0 : i32
    %c0_i32_1 = arith.constant 0 : i32
    return %c0_i32, %c0_i32_0 : i32, i32
  }
  func.func @transform_7(%arg0: i32) -> (i32, i32) {
    %c0_i32 = arith.constant 0 : i32
    %c0_i32_0 = arith.constant 0 : i32
    %c0_i32_1 = arith.constant 0 : i32
    return %c0_i32, %c0_i32_0 : i32, i32
  }
  func.func @transform_8(%arg0: i32) -> (i32, i32) {
    %c0_i32 = arith.constant 0 : i32
    %c0_i32_0 = arith.constant 0 : i32
    %c0_i32_1 = arith.constant 0 : i32
    return %c0_i32, %c0_i32_0 : i32, i32
  }
  func.func @transform_9(%arg0: i32) -> (i32, i32) {
    %c0_i32 = arith.constant 0 : i32
    %c0_i32_0 = arith.constant 0 : i32
    %c0_i32_1 = arith.constant 0 : i32
    return %c0_i32, %c0_i32_0 : i32, i32
  }
  func.func @transform_10(%arg0: i32) -> (i32, i32) {
    %c0_i32 = arith.constant 0 : i32
    %c0_i32_0 = arith.constant 0 : i32
    %c0_i32_1 = arith.constant 0 : i32
    return %c0_i32, %c0_i32_0 : i32, i32
  }
  func.func @transform_11(%arg0: i32) -> (i32, i32) {
    %c0_i32 = arith.constant 0 : i32
    %c0_i32_0 = arith.constant 0 : i32
    %c0_i32_1 = arith.constant 0 : i32
    return %c0_i32, %c0_i32_0 : i32, i32
  }
  func.func @transform_12(%arg0: i32) -> (i32, i32) {
    %c0_i32 = arith.constant 0 : i32
    %c0_i32_0 = arith.constant 0 : i32
    %c0_i32_1 = arith.constant 0 : i32
    return %c0_i32, %c0_i32_0 : i32, i32
  }
  func.func @transform_13(%arg0: i32) -> (i32, i32) {
    %c0_i32 = arith.constant 0 : i32
    %c0_i32_0 = arith.constant 0 : i32
    %c0_i32_1 = arith.constant 0 : i32
    return %c0_i32, %c0_i32_0 : i32, i32
  }
  func.func @transform_14(%arg0: i32) -> (i32, i32) {
    %c0_i32 = arith.constant 0 : i32
    %c0_i32_0 = arith.constant 0 : i32
    %c0_i32_1 = arith.constant 0 : i32
    return %c0_i32, %c0_i32_0 : i32, i32
  }
  func.func @transform_15(%arg0: i32) -> (i32, i32, i32) {
    %c0_i32 = arith.constant 0 : i32
    %c0_i32_0 = arith.constant 0 : i32
    %c0_i32_1 = arith.constant 0 : i32
    return %arg0, %c0_i32, %c0_i32_0 : i32, i32, i32
  }
  func.func @transform_16(%arg0: i32) -> (i32, i32, i32) {
    %c0_i32 = arith.constant 0 : i32
    %c0_i32_0 = arith.constant 0 : i32
    %c0_i32_1 = arith.constant 0 : i32
    return %arg0, %c0_i32, %c0_i32_0 : i32, i32, i32
  }
  func.func @transform_17(%arg0: i32) -> (i32, i32, i32) {
    %c0_i32 = arith.constant 0 : i32
    %c0_i32_0 = arith.constant 0 : i32
    %c0_i32_1 = arith.constant 0 : i32
    return %arg0, %c0_i32, %c0_i32_0 : i32, i32, i32
  }
}

</mosaic_0001>

<llo_original>
// kernel: tpu_custom_call.1
$region0: #{tpu_custom_call.1}
  #allocation0 [shape = 'u32[]', space=smem, size = 0x4, offset = 0x4, fixed_abs, tag = 'smem constant byte address 0x4 - core index']
  #allocation1 [shape = 'u32[144,128]{1,0:T(1,128)}', space=vmem, size = 0x12000, scoped, tag = 'internal scratch']
  %s0 = inlined_call_operand.vmem [shape: f32[2,8,32], index: 0, kind: input, shape index: {}]
  %s1 = inlined_call_operand.vmem [shape: f32[2,1,8], index: 1, kind: input, shape index: {}]
  %s2 = inlined_call_operand.vmem [shape: f32[2,8,8], index: 2, kind: input, shape index: {}]
  %s3 = inlined_call_operand.vmem [shape: bf16[32,96], index: 3, kind: input, shape index: {}]
  %s4 = inlined_call_operand.hbm [shape: f32[1,96], index: 4, kind: input, shape index: {}]
  %s5 = inlined_call_operand.hbm [shape: bf16[32,32], index: 5, kind: input, shape index: {}]
  %s6 = inlined_call_operand.hbm [shape: f32[1,32], index: 6, kind: input, shape index: {}]
  %s7 = inlined_call_operand.hbm [shape: f32[1,32], index: 7, kind: input, shape index: {}]
  %s8 = inlined_call_operand.hbm [shape: f32[1,32], index: 8, kind: input, shape index: {}]
  %s9 = inlined_call_operand.vmem [shape: bf16[32,64], index: 9, kind: input, shape index: {}]
  %s10 = inlined_call_operand.vmem [shape: f32[1,64], index: 10, kind: input, shape index: {}]
  %s11 = inlined_call_operand.vmem [shape: bf16[64,32], index: 11, kind: input, shape index: {}]
  %s12 = inlined_call_operand.vmem [shape: f32[1,32], index: 12, kind: input, shape index: {}]
  %s13 = inlined_call_operand.vmem [shape: f32[1,32], index: 13, kind: input, shape index: {}]
  %s14 = inlined_call_operand.vmem [shape: f32[1,32], index: 14, kind: input, shape index: {}]
  %s15 = inlined_call_operand.hbm [shape: f32[2,8,32], index: 15, kind: output, shape index: {0}]
  %s16 = inlined_call_operand.hbm [shape: f32[2,8,8], index: 16, kind: output, shape index: {1}]
  %s17 = inlined_call_operand.vmem [shape: f32[2,1,1], index: 17, kind: output, shape index: {2}]
  %18 = xla_tuple %s15, %s16, %s17
  %s19 = sld [smem:[#allocation0]]
  $region129: #{tpu_custom_call.1} parent=0
    _
  %s21 = ssub.s32 1, %s19
  %s22 = scalar_select 0, %s21, %s19
  $region1: #{tpu_custom_call.1} parent=0
    #allocation2 [shape = 'u8[512]{0}', space=vmem, size = 0x400, scoped, tag = 'input window, operand 4, single buffered']
    #allocation3 [shape = 's32[2]{0}', space=sflag, size = 0x8, scoped, tag = 'scoped memory for tpu_custom_call.1']
    #allocation4 [shape = 's32[2]{0}', space=sflag, size = 0x8, scoped, tag = 'scoped memory for tpu_custom_call.1']
    #allocation5 [shape = 'u8[8192]{0}', space=vmem, size = 0x2000, scoped, tag = 'input window, operand 5, single buffered']
    #allocation6 [shape = 's32[1]{0}', space=sflag, size = 0x4, scoped, tag = 'scoped memory for tpu_custom_call.1']
    #allocation7 [shape = 'u8[512]{0}', space=vmem, size = 0x400, scoped, tag = 'input window, operand 6, single buffered']
    #allocation8 [shape = 'u8[512]{0}', space=vmem, size = 0x400, scoped, tag = 'input window, operand 7, single buffered']
    #allocation9 [shape = 's32[1]{0}', space=sflag, size = 0x4, scoped, tag = 'scoped memory for tpu_custom_call.1']
    #allocation10 [shape = 'u8[512]{0}', space=vmem, size = 0x400, scoped, tag = 'input window, operand 8, single buffered']
    #allocation11 [shape = 'u8[8192]{0}', space=vmem, size = 0x2000, scoped, tag = 'output window, operand 0']
    #allocation12 [shape = 'u8[8192]{0}', space=vmem, size = 0x2000, scoped, tag = 'output window, operand 1']
    #allocation13 [shape = 's32[2]{0}', space=sflag, size = 0x8, scoped, tag = 'scoped memory for tpu_custom_call.1']
    %23 = vsyncpa [#allocation3], 0
    %24 = vsyncpa [#allocation6], 0
    %25 = vsyncpa [#allocation9], 0
    %26 = vsyncpa [#allocation4], 0
    %s27 = scalar_lea.sflag [#allocation4], 1
    %28 = vsyncpa %s27, 0
    %29 = vsyncpa [#allocation13], 0
    %s30 = scalar_lea.sflag [#allocation13], 1
    %31 = vsyncpa %s30, 0
    loop: start=0, step=1, limit=4
    $region2: #{tpu_custom_call.1} parent=1 // loop_pre_header
      _
    $region3: #{tpu_custom_call.1} parent=1 // loop_header
      %s33 = sphi 0, %s37
      %p34 = scmp.ge.s32.totalorder %s33, 4
      %s43 = sphi 0, %s45
      %s46 = sphi 0, %s43
      %s47 = sphi 0, %s46
      %s63 = sphi 0, %s47
      %s69 = sphi 0, %s71
      %s72 = sphi 0, %s69
      %s73 = sphi 0, %s72
      %s89 = sphi 0, %s73
      %s95 = sphi 0, %s97
      %s98 = sphi 0, %s95
      %s99 = sphi 0, %s98
      %s115 = sphi 0, %s99
      %s119 = sphi 0, %s119
      %s121 = sphi 0, %s119
      %s122 = sphi 0, %s121
      %s136 = sphi 0, %s122
      %s140 = sphi 0, %s140
      %s142 = sphi 0, %s140
      %s143 = sphi 0, %s142
      %s157 = sphi 0, %s143
      %s161 = sphi 0, %s161
      %s163 = sphi 0, %s161
      %s164 = sphi 0, %s163
      %s178 = sphi 0, %s164
      %s182 = sphi 0, %s182
      %s184 = sphi 0, %s182
      %s185 = sphi 0, %s184
      %s199 = sphi 0, %s185
      %s203 = sphi 0, %s203
      %s205 = sphi 0, %s203
      %s206 = sphi 0, %s205
      %s220 = sphi 0, %s206
      %s224 = sphi 0, %s224
      %s226 = sphi 0, %s224
      %s227 = sphi 0, %s226
      %s241 = sphi 0, %s227
      %s245 = sphi 0, %s245
      %s247 = sphi 0, %s245
      %s248 = sphi 0, %s247
      %s262 = sphi 0, %s248
      %s266 = sphi 0, %s266
      %s268 = sphi 0, %s266
      %s269 = sphi 0, %s268
      %s283 = sphi 0, %s269
      %s287 = sphi 0, %s287
      %s289 = sphi 0, %s287
      %s290 = sphi 0, %s289
      %s304 = sphi 0, %s290
      %s308 = sphi 0, %s308
      %s310 = sphi 0, %s308
      %s311 = sphi 0, %s310
      %s325 = sphi 0, %s311
      %s329 = sphi 0, %s329
      %s331 = sphi 0, %s329
      %s332 = sphi 0, %s331
      %s346 = sphi 0, %s332
      %s350 = sphi 0, %s350
      %s352 = sphi 0, %s350
      %s353 = sphi 0, %s352
      %s367 = sphi 0, %s353
      %s373 = sphi 0, %s375
      %s376 = sphi 0, %s373
      %s377 = sphi 0, %s376
      %s393 = sphi 0, %s377
      %s399 = sphi 0, %s401
      %s402 = sphi 0, %s399
      %s403 = sphi 0, %s402
      %s419 = sphi 0, %s403
      %s425 = sphi 0, %s427
      %s428 = sphi 0, %s425
      %s429 = sphi 0, %s428
      %s445 = sphi 0, %s429
    $region4: #{tpu_custom_call.1} parent=1 // loop_header_branch
      %36 = sbr.rel (%p34) target = $region8
    $region5: #{tpu_custom_call.1} parent=1 // loop_body
      %s38 = ssub.s32 %s33, 1
      %s39 = ssub.s32 %s33, 2
      %s40 = sadd.s32 %s33, 1
      %s41 = ssub.s32 %s33, %s40
      %p42 = scmp.eq.s32.totalorder %s41, 0
      %s44 = sadd.s32 %s43, 1
      %s45 = scalar_select %p42, %s43, %s44
      %p48 = pneg %p42
      %p49 = scmp.eq.s32.totalorder %s33, 1
      %p50 = por %p48, %p49
      %p51 = scmp.ne.s32.totalorder %s43, %s46
      %p52 = scmp.eq.s32.totalorder %s33, 0
      %p53 = por %p51, %p52
      %p54 = scmp.ne.s32.totalorder %s43, %s46
      %p55 = scmp.eq.s32.totalorder %s38, 1
      %p56 = por %p54, %p55
      %p57 = scmp.ne.s32.totalorder %s46, %s47
      %p58 = scmp.eq.s32.totalorder %s38, 0
      %p59 = por %p57, %p58
      %p60 = scmp.ne.s32.totalorder %s46, %s47
      %p61 = scmp.eq.s32.totalorder %s39, 1
      %p62 = por %p60, %p61
      %p64 = scmp.ne.s32.totalorder %s47, %s63
      %p65 = scmp.eq.s32.totalorder %s39, 0
      %p66 = por %p64, %p65
      %s67 = ssub.s32 %s33, %s40
      %p68 = scmp.eq.s32.totalorder %s67, 0
      %s70 = sadd.s32 %s69, 1
      %s71 = scalar_select %p68, %s69, %s70
      %p74 = pneg %p68
      %p75 = scmp.eq.s32.totalorder %s33, 1
      %p76 = por %p74, %p75
      %p77 = scmp.ne.s32.totalorder %s69, %s72
      %p78 = scmp.eq.s32.totalorder %s33, 0
      %p79 = por %p77, %p78
      %p80 = scmp.ne.s32.totalorder %s69, %s72
      %p81 = scmp.eq.s32.totalorder %s38, 1
      %p82 = por %p80, %p81
      %p83 = scmp.ne.s32.totalorder %s72, %s73
      %p84 = scmp.eq.s32.totalorder %s38, 0
      %p85 = por %p83, %p84
      %p86 = scmp.ne.s32.totalorder %s72, %s73
      %p87 = scmp.eq.s32.totalorder %s39, 1
      %p88 = por %p86, %p87
      %p90 = scmp.ne.s32.totalorder %s73, %s89
      %p91 = scmp.eq.s32.totalorder %s39, 0
      %p92 = por %p90, %p91
      %s93 = ssub.s32 %s33, %s40
      %p94 = scmp.eq.s32.totalorder %s93, 0
      %s96 = sadd.s32 %s95, 1
      %s97 = scalar_select %p94, %s95, %s96
      %p100 = pneg %p94
      %p101 = scmp.eq.s32.totalorder %s33, 1
      %p102 = por %p100, %p101
      %p103 = scmp.ne.s32.totalorder %s95, %s98
      %p104 = scmp.eq.s32.totalorder %s33, 0
      %p105 = por %p103, %p104
      %p106 = scmp.ne.s32.totalorder %s95, %s98
      %p107 = scmp.eq.s32.totalorder %s38, 1
      %p108 = por %p106, %p107
      %p109 = scmp.ne.s32.totalorder %s98, %s99
      %p110 = scmp.eq.s32.totalorder %s38, 0
      %p111 = por %p109, %p110
      %p112 = scmp.ne.s32.totalorder %s98, %s99
      %p113 = scmp.eq.s32.totalorder %s39, 1
      %p114 = por %p112, %p113
      %p116 = scmp.ne.s32.totalorder %s99, %s115
      %p117 = scmp.eq.s32.totalorder %s39, 0
      %p118 = por %p116, %p117
      %s120 = sadd.s32 %s119, 1
      %p123 = scmp.eq.s32.totalorder %s33, 1
      %p124 = scmp.ne.s32.totalorder %s119, %s121
      %p125 = scmp.eq.s32.totalorder %s33, 0
      %p126 = por %p124, %p125
      %p127 = scmp.ne.s32.totalorder %s119, %s121
      %p128 = scmp.eq.s32.totalorder %s38, 1
      %p129 = por %p127, %p128
      %p130 = scmp.ne.s32.totalorder %s121, %s122
      %p131 = scmp.eq.s32.totalorder %s38, 0
      %p132 = por %p130, %p131
      %p133 = scmp.ne.s32.totalorder %s121, %s122
      %p134 = scmp.eq.s32.totalorder %s39, 1
      %p135 = por %p133, %p134
      %p137 = scmp.ne.s32.totalorder %s122, %s136
      %p138 = scmp.eq.s32.totalorder %s39, 0
      %p139 = por %p137, %p138
      %s141 = sadd.s32 %s140, 1
      %p144 = scmp.eq.s32.totalorder %s33, 1
      %p145 = scmp.ne.s32.totalorder %s140, %s142
      %p146 = scmp.eq.s32.totalorder %s33, 0
      %p147 = por %p145, %p146
      %p148 = scmp.ne.s32.totalorder %s140, %s142
      %p149 = scmp.eq.s32.totalorder %s38, 1
      %p150 = por %p148, %p149
      %p151 = scmp.ne.s32.totalorder %s142, %s143
      %p152 = scmp.eq.s32.totalorder %s38, 0
      %p153 = por %p151, %p152
      %p154 = scmp.ne.s32.totalorder %s142, %s143
      %p155 = scmp.eq.s32.totalorder %s39, 1
      %p156 = por %p154, %p155
      %p158 = scmp.ne.s32.totalorder %s143, %s157
      %p159 = scmp.eq.s32.totalorder %s39, 0
      %p160 = por %p158, %p159
      %s162 = sadd.s32 %s161, 1
      %p165 = scmp.eq.s32.totalorder %s33, 1
      %p166 = scmp.ne.s32.totalorder %s161, %s163
      %p167 = scmp.eq.s32.totalorder %s33, 0
      %p168 = por %p166, %p167
      %p169 = scmp.ne.s32.totalorder %s161, %s163
      %p170 = scmp.eq.s32.totalorder %s38, 1
      %p171 = por %p169, %p170
      %p172 = scmp.ne.s32.totalorder %s163, %s164
      %p173 = scmp.eq.s32.totalorder %s38, 0
      %p174 = por %p172, %p173
      %p175 = scmp.ne.s32.totalorder %s163, %s164
      %p176 = scmp.eq.s32.totalorder %s39, 1
      %p177 = por %p175, %p176
      %p179 = scmp.ne.s32.totalorder %s164, %s178
      %p180 = scmp.eq.s32.totalorder %s39, 0
      %p181 = por %p179, %p180
      %s183 = sadd.s32 %s182, 1
      %p186 = scmp.eq.s32.totalorder %s33, 1
      %p187 = scmp.ne.s32.totalorder %s182, %s184
      %p188 = scmp.eq.s32.totalorder %s33, 0
      %p189 = por %p187, %p188
      %p190 = scmp.ne.s32.totalorder %s182, %s184
      %p191 = scmp.eq.s32.totalorder %s38, 1
      %p192 = por %p190, %p191
      %p193 = scmp.ne.s32.totalorder %s184, %s185
      %p194 = scmp.eq.s32.totalorder %s38, 0
      %p195 = por %p193, %p194
      %p196 = scmp.ne.s32.totalorder %s184, %s185
      %p197 = scmp.eq.s32.totalorder %s39, 1
      %p198 = por %p196, %p197
      %p200 = scmp.ne.s32.totalorder %s185, %s199
      %p201 = scmp.eq.s32.totalorder %s39, 0
      %p202 = por %p200, %p201
      %s204 = sadd.s32 %s203, 1
      %p207 = scmp.eq.s32.totalorder %s33, 1
      %p208 = scmp.ne.s32.totalorder %s203, %s205
      %p209 = scmp.eq.s32.totalorder %s33, 0
      %p210 = por %p208, %p209
      %p211 = scmp.ne.s32.totalorder %s203, %s205
      %p212 = scmp.eq.s32.totalorder %s38, 1
      %p213 = por %p211, %p212
      %p214 = scmp.ne.s32.totalorder %s205, %s206
      %p215 = scmp.eq.s32.totalorder %s38, 0
      %p216 = por %p214, %p215
      %p217 = scmp.ne.s32.totalorder %s205, %s206
      %p218 = scmp.eq.s32.totalorder %s39, 1
      %p219 = por %p217, %p218
      %p221 = scmp.ne.s32.totalorder %s206, %s220
      %p222 = scmp.eq.s32.totalorder %s39, 0
      %p223 = por %p221, %p222
      %s225 = sadd.s32 %s224, 1
      %p228 = scmp.eq.s32.totalorder %s33, 1
      %p229 = scmp.ne.s32.totalorder %s224, %s226
      %p230 = scmp.eq.s32.totalorder %s33, 0
      %p231 = por %p229, %p230
      %p232 = scmp.ne.s32.totalorder %s224, %s226
      %p233 = scmp.eq.s32.totalorder %s38, 1
      %p234 = por %p232, %p233
      %p235 = scmp.ne.s32.totalorder %s226, %s227
      %p236 = scmp.eq.s32.totalorder %s38, 0
      %p237 = por %p235, %p236
      %p238 = scmp.ne.s32.totalorder %s226, %s227
      %p239 = scmp.eq.s32.totalorder %s39, 1
      %p240 = por %p238, %p239
      %p242 = scmp.ne.s32.totalorder %s227, %s241
      %p243 = scmp.eq.s32.totalorder %s39, 0
      %p244 = por %p242, %p243
      %s246 = sadd.s32 %s245, 1
      %p249 = scmp.eq.s32.totalorder %s33, 1
      %p250 = scmp.ne.s32.totalorder %s245, %s247
      %p251 = scmp.eq.s32.totalorder %s33, 0
      %p252 = por %p250, %p251
      %p253 = scmp.ne.s32.totalorder %s245, %s247
      %p254 = scmp.eq.s32.totalorder %s38, 1
      %p255 = por %p253, %p254
      %p256 = scmp.ne.s32.totalorder %s247, %s248
      %p257 = scmp.eq.s32.totalorder %s38, 0
      %p258 = por %p256, %p257
      %p259 = scmp.ne.s32.totalorder %s247, %s248
      %p260 = scmp.eq.s32.totalorder %s39, 1
      %p261 = por %p259, %p260
      %p263 = scmp.ne.s32.totalorder %s248, %s262
      %p264 = scmp.eq.s32.totalorder %s39, 0
      %p265 = por %p263, %p264
      %s267 = sadd.s32 %s266, 1
      %p270 = scmp.eq.s32.totalorder %s33, 1
      %p271 = scmp.ne.s32.totalorder %s266, %s268
      %p272 = scmp.eq.s32.totalorder %s33, 0
      %p273 = por %p271, %p272
      %p274 = scmp.ne.s32.totalorder %s266, %s268
      %p275 = scmp.eq.s32.totalorder %s38, 1
      %p276 = por %p274, %p275
      %p277 = scmp.ne.s32.totalorder %s268, %s269
      %p278 = scmp.eq.s32.totalorder %s38, 0
      %p279 = por %p277, %p278
      %p280 = scmp.ne.s32.totalorder %s268, %s269
      %p281 = scmp.eq.s32.totalorder %s39, 1
      %p282 = por %p280, %p281
      %p284 = scmp.ne.s32.totalorder %s269, %s283
      %p285 = scmp.eq.s32.totalorder %s39, 0
      %p286 = por %p284, %p285
      %s288 = sadd.s32 %s287, 1
      %p291 = scmp.eq.s32.totalorder %s33, 1
      %p292 = scmp.ne.s32.totalorder %s287, %s289
      %p293 = scmp.eq.s32.totalorder %s33, 0
      %p294 = por %p292, %p293
      %p295 = scmp.ne.s32.totalorder %s287, %s289
      %p296 = scmp.eq.s32.totalorder %s38, 1
      %p297 = por %p295, %p296
      %p298 = scmp.ne.s32.totalorder %s289, %s290
      %p299 = scmp.eq.s32.totalorder %s38, 0
      %p300 = por %p298, %p299
      %p301 = scmp.ne.s32.totalorder %s289, %s290
      %p302 = scmp.eq.s32.totalorder %s39, 1
      %p303 = por %p301, %p302
      %p305 = scmp.ne.s32.totalorder %s290, %s304
      %p306 = scmp.eq.s32.totalorder %s39, 0
      %p307 = por %p305, %p306
      %s309 = sadd.s32 %s308, 1
      %p312 = scmp.eq.s32.totalorder %s33, 1
      %p313 = scmp.ne.s32.totalorder %s308, %s310
      %p314 = scmp.eq.s32.totalorder %s33, 0
      %p315 = por %p313, %p314
      %p316 = scmp.ne.s32.totalorder %s308, %s310
      %p317 = scmp.eq.s32.totalorder %s38, 1
      %p318 = por %p316, %p317
      %p319 = scmp.ne.s32.totalorder %s310, %s311
      %p320 = scmp.eq.s32.totalorder %s38, 0
      %p321 = por %p319, %p320
      %p322 = scmp.ne.s32.totalorder %s310, %s311
      %p323 = scmp.eq.s32.totalorder %s39, 1
      %p324 = por %p322, %p323
      %p326 = scmp.ne.s32.totalorder %s311, %s325
      %p327 = scmp.eq.s32.totalorder %s39, 0
      %p328 = por %p326, %p327
      %s330 = sadd.s32 %s329, 1
      %p333 = scmp.eq.s32.totalorder %s33, 1
      %p334 = scmp.ne.s32.totalorder %s329, %s331
      %p335 = scmp.eq.s32.totalorder %s33, 0
      %p336 = por %p334, %p335
      %p337 = scmp.ne.s32.totalorder %s329, %s331
      %p338 = scmp.eq.s32.totalorder %s38, 1
      %p339 = por %p337, %p338
      %p340 = scmp.ne.s32.totalorder %s331, %s332
      %p341 = scmp.eq.s32.totalorder %s38, 0
      %p342 = por %p340, %p341
      %p343 = scmp.ne.s32.totalorder %s331, %s332
      %p344 = scmp.eq.s32.totalorder %s39, 1
      %p345 = por %p343, %p344
      %p347 = scmp.ne.s32.totalorder %s332, %s346
      %p348 = scmp.eq.s32.totalorder %s39, 0
      %p349 = por %p347, %p348
      %s351 = sadd.s32 %s350, 1
      %p354 = scmp.eq.s32.totalorder %s33, 1
      %p355 = scmp.ne.s32.totalorder %s350, %s352
      %p356 = scmp.eq.s32.totalorder %s33, 0
      %p357 = por %p355, %p356
      %p358 = scmp.ne.s32.totalorder %s350, %s352
      %p359 = scmp.eq.s32.totalorder %s38, 1
      %p360 = por %p358, %p359
      %p361 = scmp.ne.s32.totalorder %s352, %s353
      %p362 = scmp.eq.s32.totalorder %s38, 0
      %p363 = por %p361, %p362
      %p364 = scmp.ne.s32.totalorder %s352, %s353
      %p365 = scmp.eq.s32.totalorder %s39, 1
      %p366 = por %p364, %p365
      %p368 = scmp.ne.s32.totalorder %s353, %s367
      %p369 = scmp.eq.s32.totalorder %s39, 0
      %p370 = por %p368, %p369
      %s371 = ssub.s32 %s33, %s40
      %p372 = scmp.eq.s32.totalorder %s371, 0
      %s374 = sadd.s32 %s373, 1
      %s375 = scalar_select %p372, %s373, %s374
      %p378 = pneg %p372
      %p379 = scmp.eq.s32.totalorder %s33, 1
      %p380 = por %p378, %p379
      %p381 = scmp.ne.s32.totalorder %s373, %s376
      %p382 = scmp.eq.s32.totalorder %s33, 0
      %p383 = por %p381, %p382
      %p384 = scmp.ne.s32.totalorder %s373, %s376
      %p385 = scmp.eq.s32.totalorder %s38, 1
      %p386 = por %p384, %p385
      %p387 = scmp.ne.s32.totalorder %s376, %s377
      %p388 = scmp.eq.s32.totalorder %s38, 0
      %p389 = por %p387, %p388
      %p390 = scmp.ne.s32.totalorder %s376, %s377
      %p391 = scmp.eq.s32.totalorder %s39, 1
      %p392 = por %p390, %p391
      %p394 = scmp.ne.s32.totalorder %s377, %s393
      %p395 = scmp.eq.s32.totalorder %s39, 0
      %p396 = por %p394, %p395
      %s397 = ssub.s32 %s33, %s40
      %p398 = scmp.eq.s32.totalorder %s397, 0
      %s400 = sadd.s32 %s399, 1
      %s401 = scalar_select %p398, %s399, %s400
      %p404 = pneg %p398
      %p405 = scmp.eq.s32.totalorder %s33, 1
      %p406 = por %p404, %p405
      %p407 = scmp.ne.s32.totalorder %s399, %s402
      %p408 = scmp.eq.s32.totalorder %s33, 0
      %p409 = por %p407, %p408
      %p410 = scmp.ne.s32.totalorder %s399, %s402
      %p411 = scmp.eq.s32.totalorder %s38, 1
      %p412 = por %p410, %p411
      %p413 = scmp.ne.s32.totalorder %s402, %s403
      %p414 = scmp.eq.s32.totalorder %s38, 0
      %p415 = por %p413, %p414
      %p416 = scmp.ne.s32.totalorder %s402, %s403
      %p417 = scmp.eq.s32.totalorder %s39, 1
      %p418 = por %p416, %p417
      %p420 = scmp.ne.s32.totalorder %s403, %s419
      %p421 = scmp.eq.s32.totalorder %s39, 0
      %p422 = por %p420, %p421
      %s423 = ssub.s32 %s33, %s40
      %p424 = scmp.eq.s32.totalorder %s423, 0
      %s426 = sadd.s32 %s425, 1
      %s427 = scalar_select %p424, %s425, %s426
      %p430 = pneg %p424
      %p431 = scmp.eq.s32.totalorder %s33, 1
      %p432 = por %p430, %p431
      %p433 = scmp.ne.s32.totalorder %s425, %s428
      %p434 = scmp.eq.s32.totalorder %s33, 0
      %p435 = por %p433, %p434
      %p436 = scmp.ne.s32.totalorder %s425, %s428
      %p437 = scmp.eq.s32.totalorder %s38, 1
      %p438 = por %p436, %p437
      %p439 = scmp.ne.s32.totalorder %s428, %s429
      %p440 = scmp.eq.s32.totalorder %s38, 0
      %p441 = por %p439, %p440
      %p442 = scmp.ne.s32.totalorder %s428, %s429
      %p443 = scmp.eq.s32.totalorder %s39, 1
      %p444 = por %p442, %p443
      %p446 = scmp.ne.s32.totalorder %s429, %s445
      %p447 = scmp.eq.s32.totalorder %s39, 0
      %p448 = por %p446, %p447
      %p449 = scmp.le.s32.totalorder 1, %s33
      %p450 = scmp.lt.s32.totalorder %s33, 3
      %p451 = pnand %p449, %p450
      %p452 = pneg %p451
      // Predicated region
      $region9: #{tpu_custom_call.1} parent=5 // pred_check
        _
      $region10: #{tpu_custom_call.1} parent=5 // pred_check_branch
        %454 = sbr.rel (%p451) target = $region12
      $region11: #{tpu_custom_call.1} parent=5 // pred_region
        %s455 = ssub.s32 %s33, 1
        // Predicated region
        $region13: #{tpu_custom_call.1} parent=11 // pred_check
          %p456 = pneg %p132
        $region14: #{tpu_custom_call.1} parent=11 // pred_check_branch
          %458 = sbr.rel (%p456) target = $region16
        $region15: #{tpu_custom_call.1} parent=11 // pred_region
          _
        $region16: #{tpu_custom_call.1} parent=11 // pred_fallthru
          _
        // Predicated region
        $region17: #{tpu_custom_call.1} parent=11 // pred_check
          %p459 = pneg %p153
        $region18: #{tpu_custom_call.1} parent=11 // pred_check_branch
          %461 = sbr.rel (%p459) target = $region20
        $region19: #{tpu_custom_call.1} parent=11 // pred_region
          %s463 = ssub.s32 16, 16
          %464 = vsyncadd [#allocation3], %s463
          %s466 = sshll.u32 [#allocation2], 4
          %s467 = int_to_ptr.vmem [resolvable:$true] %s466
          %469 = dma.hbm_to_vmem [thread:$0]  %s4, 16, %s467, [#allocation3]
        $region20: #{tpu_custom_call.1} parent=11 // pred_fallthru
          _
        // Predicated region
        $region21: #{tpu_custom_call.1} parent=11 // pred_check
          %p470 = pneg %p174
        $region22: #{tpu_custom_call.1} parent=11 // pred_check_branch
          %472 = sbr.rel (%p470) target = $region24
        $region23: #{tpu_custom_call.1} parent=11 // pred_region
          %s474 = ssub.s32 256, 256
          %475 = vsyncadd [#allocation6], %s474
          %s476 = sshll.u32 [#allocation5], 4
          %s477 = int_to_ptr.vmem [resolvable:$true] %s476
          %482 = dma.hbm_to_vmem [thread:$0]  %s5, 256, %s477, [#allocation6], 64, 64, 4
        $region24: #{tpu_custom_call.1} parent=11 // pred_fallthru
          _
        // Predicated region
        $region25: #{tpu_custom_call.1} parent=11 // pred_check
          %p483 = pneg %p195
        $region26: #{tpu_custom_call.1} parent=11 // pred_check_branch
          %485 = sbr.rel (%p483) target = $region28
        $region27: #{tpu_custom_call.1} parent=11 // pred_region
          %s487 = ssub.s32 16, 16
          %488 = vsyncadd [#allocation6], %s487
          %s490 = sshll.u32 [#allocation7], 4
          %s491 = int_to_ptr.vmem [resolvable:$true] %s490
          %493 = dma.hbm_to_vmem [thread:$0]  %s6, 16, %s491, [#allocation6]
        $region28: #{tpu_custom_call.1} parent=11 // pred_fallthru
          _
        // Predicated region
        $region29: #{tpu_custom_call.1} parent=11 // pred_check
          %p494 = pneg %p216
        $region30: #{tpu_custom_call.1} parent=11 // pred_check_branch
          %496 = sbr.rel (%p494) target = $region32
        $region31: #{tpu_custom_call.1} parent=11 // pred_region
          %s498 = ssub.s32 16, 16
          %499 = vsyncadd [#allocation9], %s498
          %s501 = sshll.u32 [#allocation8], 4
          %s502 = int_to_ptr.vmem [resolvable:$true] %s501
          %504 = dma.hbm_to_vmem [thread:$0]  %s7, 16, %s502, [#allocation9]
        $region32: #{tpu_custom_call.1} parent=11 // pred_fallthru
          _
        // Predicated region
        $region33: #{tpu_custom_call.1} parent=11 // pred_check
          %p505 = pneg %p237
        $region34: #{tpu_custom_call.1} parent=11 // pred_check_branch
          %507 = sbr.rel (%p505) target = $region36
        $region35: #{tpu_custom_call.1} parent=11 // pred_region
          %s509 = ssub.s32 16, 16
          %510 = vsyncadd [#allocation9], %s509
          %s512 = sshll.u32 [#allocation10], 4
          %s513 = int_to_ptr.vmem [resolvable:$true] %s512
          %515 = dma.hbm_to_vmem [thread:$0]  %s8, 16, %s513, [#allocation9]
        $region36: #{tpu_custom_call.1} parent=11 // pred_fallthru
          _
        // Predicated region
        $region37: #{tpu_custom_call.1} parent=11 // pred_check
          %p516 = pneg %p258
        $region38: #{tpu_custom_call.1} parent=11 // pred_check_branch
          %518 = sbr.rel (%p516) target = $region40
        $region39: #{tpu_custom_call.1} parent=11 // pred_region
          _
        $region40: #{tpu_custom_call.1} parent=11 // pred_fallthru
          _
        // Predicated region
        $region41: #{tpu_custom_call.1} parent=11 // pred_check
          %p519 = pneg %p279
        $region42: #{tpu_custom_call.1} parent=11 // pred_check_branch
          %521 = sbr.rel (%p519) target = $region44
        $region43: #{tpu_custom_call.1} parent=11 // pred_region
          _
        $region44: #{tpu_custom_call.1} parent=11 // pred_fallthru
          _
        // Predicated region
        $region45: #{tpu_custom_call.1} parent=11 // pred_check
          %p522 = pneg %p300
        $region46: #{tpu_custom_call.1} parent=11 // pred_check_branch
          %524 = sbr.rel (%p522) target = $region48
        $region47: #{tpu_custom_call.1} parent=11 // pred_region
          _
        $region48: #{tpu_custom_call.1} parent=11 // pred_fallthru
          _
        // Predicated region
        $region49: #{tpu_custom_call.1} parent=11 // pred_check
          %p525 = pneg %p321
        $region50: #{tpu_custom_call.1} parent=11 // pred_check_branch
          %527 = sbr.rel (%p525) target = $region52
        $region51: #{tpu_custom_call.1} parent=11 // pred_region
          _
        $region52: #{tpu_custom_call.1} parent=11 // pred_fallthru
          _
        // Predicated region
        $region53: #{tpu_custom_call.1} parent=11 // pred_check
          %p528 = pneg %p342
        $region54: #{tpu_custom_call.1} parent=11 // pred_check_branch
          %530 = sbr.rel (%p528) target = $region56
        $region55: #{tpu_custom_call.1} parent=11 // pred_region
          _
        $region56: #{tpu_custom_call.1} parent=11 // pred_fallthru
          _
        // Predicated region
        $region57: #{tpu_custom_call.1} parent=11 // pred_check
          %p531 = pneg %p363
        $region58: #{tpu_custom_call.1} parent=11 // pred_check_branch
          %533 = sbr.rel (%p531) target = $region60
        $region59: #{tpu_custom_call.1} parent=11 // pred_region
          _
        $region60: #{tpu_custom_call.1} parent=11 // pred_fallthru
          _
      $region12: #{tpu_custom_call.1} parent=5 // pred_fallthru
        _
      %p534 = scmp.lt.s32.totalorder %s33, 2
      // Predicated region
      $region61: #{tpu_custom_call.1} parent=5 // pred_check
        %p535 = pneg %p534
      $region62: #{tpu_custom_call.1} parent=5 // pred_check_branch
        %537 = sbr.rel (%p535) target = $region64
      $region63: #{tpu_custom_call.1} parent=5 // pred_region
        // Predicated region
        $region65: #{tpu_custom_call.1} parent=63 // pred_check
          %p538 = pneg %p53
        $region66: #{tpu_custom_call.1} parent=63 // pred_check_branch
          %540 = sbr.rel (%p538) target = $region68
        $region67: #{tpu_custom_call.1} parent=63 // pred_region
          %p541 = scmp.lt.s32.totalorder %s33, 1
          %s542 = scalar_select %p541, %s33, 1
          %s543 = smul.addr %s542, 8
          %s544 = scalar_lea.vmem %s0, %s543
        $region68: #{tpu_custom_call.1} parent=63 // pred_fallthru
          _
        // Predicated region
        $region69: #{tpu_custom_call.1} parent=63 // pred_check
          %p545 = pneg %p79
        $region70: #{tpu_custom_call.1} parent=63 // pred_check_branch
          %547 = sbr.rel (%p545) target = $region72
        $region71: #{tpu_custom_call.1} parent=63 // pred_region
          %p548 = scmp.lt.s32.totalorder %s33, 1
          %s549 = scalar_select %p548, %s33, 1
          %s550 = scalar_lea.vmem %s1, %s549
        $region72: #{tpu_custom_call.1} parent=63 // pred_fallthru
          _
        // Predicated region
        $region73: #{tpu_custom_call.1} parent=63 // pred_check
          %p551 = pneg %p105
        $region74: #{tpu_custom_call.1} parent=63 // pred_check_branch
          %553 = sbr.rel (%p551) target = $region76
        $region75: #{tpu_custom_call.1} parent=63 // pred_region
          %p554 = scmp.lt.s32.totalorder %s33, 1
          %s555 = scalar_select %p554, %s33, 1
          %s556 = smul.addr %s555, 8
          %s557 = scalar_lea.vmem %s2, %s556
        $region76: #{tpu_custom_call.1} parent=63 // pred_fallthru
          _
      $region64: #{tpu_custom_call.1} parent=5 // pred_fallthru
        _
      %p558 = scmp.le.s32.totalorder 1, %s33
      %p559 = scmp.lt.s32.totalorder %s33, 3
      %p560 = pnand %p558, %p559
      %p561 = pneg %p560
      // Predicated region
      $region77: #{tpu_custom_call.1} parent=5 // pred_check
        _
      $region78: #{tpu_custom_call.1} parent=5 // pred_check_branch
        %563 = sbr.rel (%p560) target = $region80
      $region79: #{tpu_custom_call.1} parent=5 // pred_region
        %s564 = ssub.s32 %s33, 1
        // Predicated region
        $region81: #{tpu_custom_call.1} parent=79 // pred_check
          %p565 = pneg %p153
        $region82: #{tpu_custom_call.1} parent=79 // pred_check_branch
          %567 = sbr.rel (%p565) target = $region84
        $region83: #{tpu_custom_call.1} parent=79 // pred_region
          %568 = dma.done [#allocation3], 16
        $region84: #{tpu_custom_call.1} parent=79 // pred_fallthru
          _
        // Predicated region
        $region85: #{tpu_custom_call.1} parent=79 // pred_check
          %p569 = pneg %p174
        $region86: #{tpu_custom_call.1} parent=79 // pred_check_branch
          %571 = sbr.rel (%p569) target = $region88
        $region87: #{tpu_custom_call.1} parent=79 // pred_region
          %572 = dma.done [#allocation6], 256
        $region88: #{tpu_custom_call.1} parent=79 // pred_fallthru
          _
        // Predicated region
        $region89: #{tpu_custom_call.1} parent=79 // pred_check
          %p573 = pneg %p195
        $region90: #{tpu_custom_call.1} parent=79 // pred_check_branch
          %575 = sbr.rel (%p573) target = $region92
        $region91: #{tpu_custom_call.1} parent=79 // pred_region
          %576 = dma.done [#allocation6], 16
        $region92: #{tpu_custom_call.1} parent=79 // pred_fallthru
          _
        // Predicated region
        $region93: #{tpu_custom_call.1} parent=79 // pred_check
          %p577 = pneg %p216
        $region94: #{tpu_custom_call.1} parent=79 // pred_check_branch
          %579 = sbr.rel (%p577) target = $region96
        $region95: #{tpu_custom_call.1} parent=79 // pred_region
          %580 = dma.done [#allocation9], 16
        $region96: #{tpu_custom_call.1} parent=79 // pred_fallthru
          _
        // Predicated region
        $region97: #{tpu_custom_call.1} parent=79 // pred_check
          %p581 = pneg %p237
        $region98: #{tpu_custom_call.1} parent=79 // pred_check_branch
          %583 = sbr.rel (%p581) target = $region100
        $region99: #{tpu_custom_call.1} parent=79 // pred_region
          %584 = dma.done [#allocation9], 16
        $region100: #{tpu_custom_call.1} parent=79 // pred_fallthru
          _
        %p585 = scmp.lt.s32.totalorder %s38, 1
        %s586 = scalar_select %p585, %s38, 1
        %s587 = smul.addr %s586, 8
        %s588 = scalar_lea.vmem %s0, %s587
        %p589 = pneg %p59
        %p590 = pneg %p56
        %p591 = scmp.lt.s32.totalorder %s38, 1
        %s592 = scalar_select %p591, %s38, 1
        %s593 = scalar_lea.vmem %s1, %s592
        %p594 = pneg %p85
        %p595 = pneg %p82
        %p596 = scmp.lt.s32.totalorder %s38, 1
        %s597 = scalar_select %p596, %s38, 1
        %s598 = smul.addr %s597, 8
        %s599 = scalar_lea.vmem %s2, %s598
        %p600 = pneg %p111
        %p601 = pneg %p108
        %p602 = pneg %p132
        %p603 = pneg %p129
        %p604 = pneg %p153
        %p605 = pneg %p150
        %p606 = pneg %p174
        %p607 = pneg %p171
        %p608 = pneg %p195
        %p609 = pneg %p192
        %p610 = pneg %p216
        %p611 = pneg %p213
        %p612 = pneg %p237
        %p613 = pneg %p234
        %p614 = pneg %p258
        %p615 = pneg %p255
        %p616 = pneg %p279
        %p617 = pneg %p276
        %p618 = pneg %p300
        %p619 = pneg %p297
        %p620 = pneg %p321
        %p621 = pneg %p318
        %p622 = pneg %p342
        %p623 = pneg %p339
        %p624 = pneg %p363
        %p625 = pneg %p360
        %p626 = pneg %p389
        %p627 = pneg %p386
        %s628 = sand.u32 %s376, 1
        %s629 = scalar_lea.sflag [#allocation4], %s628
        %s630 = sand.u32 %s376, 1
        %s631 = smul.addr %s630, 8
        %s632 = scalar_lea.vmem [#allocation11], %s631
        %p633 = pneg %p415
        %p634 = pneg %p412
        %s635 = sand.u32 %s402, 1
        %s636 = scalar_lea.sflag [#allocation13], %s635
        %s637 = sand.u32 %s402, 1
        %s638 = smul.addr %s637, 8
        %s639 = scalar_lea.vmem [#allocation12], %s638
        %p640 = pneg %p441
        %p641 = pneg %p438
        %p642 = scmp.lt.s32.totalorder %s38, 1
        %s643 = scalar_select %p642, %s38, 1
        %s644 = scalar_lea.vmem %s17, %s643
        %p645 = scmp.lt.s32.totalorder %s38, 1
        %s646 = scalar_select %p645, %s38, 1
        %s647 = smul.addr %s646, 8
        %s648 = scalar_lea.vmem %s0, %s647
        %p649 = scmp.lt.s32.totalorder %s38, 1
        %s650 = scalar_select %p649, %s38, 1
        %s651 = scalar_lea.vmem %s1, %s650
        %p652 = scmp.lt.s32.totalorder %s38, 1
        %s653 = scalar_select %p652, %s38, 1
        %s654 = smul.addr %s653, 8
        %s655 = scalar_lea.vmem %s2, %s654
        %p656 = scmp.lt.s32.totalorder %s38, 1
        %s657 = scalar_select %p656, %s38, 1
        %s658 = scalar_lea.vmem %s17, %s657
        %v660 = vld [vmem:[%s648] sm:$0xff]
        %v661 = vpack.c.bf16 %v660, %v660
        %v662 = vld [vmem:[%s3] sm:$0xf]
        %v663 = vld [vmem:[%s3 + $0x4] sm:$0xf]
        %v664 = vld [vmem:[%s3 + $0x8] sm:$0xf]
        %v665 = vld [vmem:[%s3 + $0xc] sm:$0xf]
        %v666 = vld [vmem:[#allocation2] sm:$0x1]
        %v668 = vlaneseq
        %v669 = vshrl.u32 %v668, 7
        %v670 = vsub.s32 0, %v669
        %v671 = vrot.slane %v666, %v670
        %v677 = vunpack.c.l.b16 %v662
        %v678 = vunpack.c.l.b16 %v663
        %v679 = vunpack.c.l.b16 %v664
        %v680 = vunpack.c.l.b16 %v665
        %v681 = vpack.c.b16 %v678, %v677
        %v682 = vpack.c.b16 %v680, %v679
        %vm685 = vcmask 261120
        %v687 = vsel %vm685, %v661, 0
        %689 = vmatprep.subr.bf16.mxu0 0
        %690 = vmatpush1.bf16.msra.mxu0 %v681
        %691 = vmatprep.subr.bf16.mxu0 0
        %692 = vmatpush1.bf16.msra.mxu0 %v682
        %693 = vmatprep.subr.bf16.mxu0 0
        %694 = vmatpush1.bf16.msra.mxu0 0
        %695 = vmatprep.subr.bf16.mxu0 0
        %696 = vmatpush1.bf16.msra.mxu0 0
        %697 = vmatprep.subr.bf16.mxu0 0
        %698 = vmatpush1.bf16.msra.mxu0 0
        %699 = vmatprep.subr.bf16.mxu0 0
        %700 = vmatpush1.bf16.msra.mxu0 0
        %701 = vmatprep.subr.bf16.mxu0 0
        %702 = vmatpush1.bf16.msra.mxu0 0
        %703 = vmatprep.subr.bf16.mxu0 0
        %704 = vmatpush1.bf16.msra.mxu0 0
        %705 = vmatprep.subr.bf16.mxu0 0
        %706 = vmatpush1.bf16.msra.mxu0 0
        %707 = vmatprep.subr.bf16.mxu0 0
        %708 = vmatpush1.bf16.msra.mxu0 0
        %709 = vmatprep.subr.bf16.mxu0 0
        %710 = vmatpush1.bf16.msra.mxu0 0
        %711 = vmatprep.subr.bf16.mxu0 0
        %712 = vmatpush1.bf16.msra.mxu0 0
        %713 = vmatprep.subr.bf16.mxu0 0
        %714 = vmatpush1.bf16.msra.mxu0 0
        %715 = vmatprep.subr.bf16.mxu0 0
        %716 = vmatpush1.bf16.msra.mxu0 0
        %717 = vmatprep.subr.bf16.mxu0 0
        %718 = vmatpush1.bf16.msra.mxu0 0
        %719 = vmatprep.subr.bf16.mxu0 0
        %720 = vmatpush1.bf16.msra.mxu0 0
        %721 = vmatprep.mubr.bf16.mxu0 0
        %722 = vmatmul.mubr.bf16.gmra.mrb[0].mxu0 %v687
        %v723 = vpop.f32.mrb[0].mxu0
        %v724 = vadd.f32 %v671, %v723
        %v725 = vpop.f32.mrb[0].mxu0
        %v726 = vpop.f32.mrb[0].mxu0
        %v727 = vpop.f32.mrb[0].mxu0
        %728 = vdwg.mxu0
        %v729 = vld [vmem:[%s651] sm:$0x1]
        %v730 = vmul.f32 %v729, -1e+30
        %v731 = vmul.f32 %v724, 0.35355338
        %v732 = vpack.c.bf16 %v731, %v731
        %v733 = vpack.c.bf16 %v724, %v724
        %v735 = vlaneseq
        %v736 = vshrl.u32 %v735, 7
        %v737 = vsub.s32 0, %v736
        %v738 = vrot.slane %v730, %v737
        %741 = vrot.lane.b32.xlu0 %v733, 96
        %v742 = vpop.permute.xlu0 %741
        %vm743 = vcmask 64512
        %v745 = vsel %vm743, %v732, 0
        %v748 = vsel %vm743, %v742, 0
        %750 = vmatprep.subr.bf16.mxu0 0
        %751 = vmatpush1.bf16.xpose.msra.mxu0 %v748
        %752 = vmatprep.subr.bf16.mxu0 0
        %753 = vmatpush1.bf16.xpose.msra.mxu0 0
        %754 = vmatprep.subr.bf16.mxu0 0
        %755 = vmatpush1.bf16.xpose.msra.mxu0 0
        %756 = vmatprep.subr.bf16.mxu0 0
        %757 = vmatpush1.bf16.xpose.msra.mxu0 0
        %758 = vmatprep.subr.bf16.mxu0 0
        %759 = vmatpush1.bf16.xpose.msra.mxu0 0
        %760 = vmatprep.subr.bf16.mxu0 0
        %761 = vmatpush1.bf16.xpose.msra.mxu0 0
        %762 = vmatprep.subr.bf16.mxu0 0
        %763 = vmatpush1.bf16.xpose.msra.mxu0 0
        %764 = vmatprep.subr.bf16.mxu0 0
        %765 = vmatpush1.bf16.xpose.msra.mxu0 0
        %766 = vmatprep.subr.bf16.mxu0 0
        %767 = vmatpush1.bf16.xpose.msra.mxu0 0
        %768 = vmatprep.subr.bf16.mxu0 0
        %769 = vmatpush1.bf16.xpose.msra.mxu0 0
        %770 = vmatprep.subr.bf16.mxu0 0
        %771 = vmatpush1.bf16.xpose.msra.mxu0 0
        %772 = vmatprep.subr.bf16.mxu0 0
        %773 = vmatpush1.bf16.xpose.msra.mxu0 0
        %774 = vmatprep.subr.bf16.mxu0 0
        %775 = vmatpush1.bf16.xpose.msra.mxu0 0
        %776 = vmatprep.subr.bf16.mxu0 0
        %777 = vmatpush1.bf16.xpose.msra.mxu0 0
        %778 = vmatprep.subr.bf16.mxu0 0
        %779 = vmatpush1.bf16.xpose.msra.mxu0 0
        %780 = vmatprep.subr.bf16.mxu0 0
        %781 = vmatpush1.bf16.xpose.msra.mxu0 0
        %782 = vmatprep.mubr.bf16.mxu0 0
        %783 = vmatmul.mubr.bf16.gmra.mrb[0].mxu0 %v745
        %v784 = vpop.f32.mrb[0].mxu0
        %v785 = vadd.f32 %v738, %v784
        %v786 = vpop.f32.mrb[0].mxu0
        %v787 = vpop.f32.mrb[0].mxu0
        %v788 = vpop.f32.mrb[0].mxu0
        %789 = vdwg.mxu0
        %v790 = vsel %vm743, %v785, -inf
        %791 = vmax.xlane.f32.xlu0 %v790
        %v792 = vpop.xlane.xlu0 %791
        %v793 = vsub.f32 %v785, %v792
        %v794 = vmul.f32 %v793, 1.442695
        %v795 = vpow.pop %v794
        %v796 = vsel %vm743, %v795, 0.0
        %797 = vadd.xlane.f32.xlu0 %v796
        %v798 = vpop.xlane.xlu0 %797
        %v799 = vrcp.pop %v798
        %v800 = vmul.f32 %v795, %v799
        %v801 = vadd.f32 %v800, 0.0
        %v802 = vpack.c.bf16 %v800, %v800
        %803 = vrot.lane.b32.xlu0 %v733, 64
        %v804 = vpop.permute.xlu0 %803
        %v806 = vsel %vm743, %v802, 0
        %vm808 = vcmask 1043456
        %v810 = vsel %vm808, %v804, 0
        %812 = vmatprep.subr.bf16.mxu0 0
        %813 = vmatpush1.bf16.msra.mxu0 %v810
        %814 = vmatprep.subr.bf16.mxu0 0
        %815 = vmatpush1.bf16.msra.mxu0 0
        %816 = vmatprep.subr.bf16.mxu0 0
        %817 = vmatpush1.bf16.msra.mxu0 0
        %818 = vmatprep.subr.bf16.mxu0 0
        %819 = vmatpush1.bf16.msra.mxu0 0
        %820 = vmatprep.subr.bf16.mxu0 0
        %821 = vmatpush1.bf16.msra.mxu0 0
        %822 = vmatprep.subr.bf16.mxu0 0
        %823 = vmatpush1.bf16.msra.mxu0 0
        %824 = vmatprep.subr.bf16.mxu0 0
        %825 = vmatpush1.bf16.msra.mxu0 0
        %826 = vmatprep.subr.bf16.mxu0 0
        %827 = vmatpush1.bf16.msra.mxu0 0
        %828 = vmatprep.subr.bf16.mxu0 0
        %829 = vmatpush1.bf16.msra.mxu0 0
        %830 = vmatprep.subr.bf16.mxu0 0
        %831 = vmatpush1.bf16.msra.mxu0 0
        %832 = vmatprep.subr.bf16.mxu0 0
        %833 = vmatpush1.bf16.msra.mxu0 0
        %834 = vmatprep.subr.bf16.mxu0 0
        %835 = vmatpush1.bf16.msra.mxu0 0
        %836 = vmatprep.subr.bf16.mxu0 0
        %837 = vmatpush1.bf16.msra.mxu0 0
        %838 = vmatprep.subr.bf16.mxu0 0
        %839 = vmatpush1.bf16.msra.mxu0 0
        %840 = vmatprep.subr.bf16.mxu0 0
        %841 = vmatpush1.bf16.msra.mxu0 0
        %842 = vmatprep.subr.bf16.mxu0 0
        %843 = vmatpush1.bf16.msra.mxu0 0
        %844 = vmatprep.mubr.bf16.mxu0 0
        %845 = vmatmul.mubr.bf16.gmra.mrb[0].mxu0 %v806
        %v846 = vpop.f32.mrb[0].mxu0
        %v847 = vadd.f32 0.0, %v846
        %v848 = vpop.f32.mrb[0].mxu0
        %v849 = vpop.f32.mrb[0].mxu0
        %v850 = vpop.f32.mrb[0].mxu0
        %851 = vdwg.mxu0
        %853 = vrot.lane.b32.xlu0 %v732, 120
        %v854 = vpop.permute.xlu0 %853
        %855 = vrot.lane.b32.xlu0 %v733, 88
        %v856 = vpop.permute.xlu0 %855
        %v858 = vsel %vm743, %v854, 0
        %v861 = vsel %vm743, %v856, 0
        %863 = vmatprep.subr.bf16.mxu0 0
        %864 = vmatpush1.bf16.xpose.msra.mxu0 %v861
        %865 = vmatprep.subr.bf16.mxu0 0
        %866 = vmatpush1.bf16.xpose.msra.mxu0 0
        %867 = vmatprep.subr.bf16.mxu0 0
        %868 = vmatpush1.bf16.xpose.msra.mxu0 0
        %869 = vmatprep.subr.bf16.mxu0 0
        %870 = vmatpush1.bf16.xpose.msra.mxu0 0
        %871 = vmatprep.subr.bf16.mxu0 0
        %872 = vmatpush1.bf16.xpose.msra.mxu0 0
        %873 = vmatprep.subr.bf16.mxu0 0
        %874 = vmatpush1.bf16.xpose.msra.mxu0 0
        %875 = vmatprep.subr.bf16.mxu0 0
        %876 = vmatpush1.bf16.xpose.msra.mxu0 0
        %877 = vmatprep.subr.bf16.mxu0 0
        %878 = vmatpush1.bf16.xpose.msra.mxu0 0
        %879 = vmatprep.subr.bf16.mxu0 0
        %880 = vmatpush1.bf16.xpose.msra.mxu0 0
        %881 = vmatprep.subr.bf16.mxu0 0
        %882 = vmatpush1.bf16.xpose.msra.mxu0 0
        %883 = vmatprep.subr.bf16.mxu0 0
        %884 = vmatpush1.bf16.xpose.msra.mxu0 0
        %885 = vmatprep.subr.bf16.mxu0 0
        %886 = vmatpush1.bf16.xpose.msra.mxu0 0
        %887 = vmatprep.subr.bf16.mxu0 0
        %888 = vmatpush1.bf16.xpose.msra.mxu0 0
        %889 = vmatprep.subr.bf16.mxu0 0
        %890 = vmatpush1.bf16.xpose.msra.mxu0 0
        %891 = vmatprep.subr.bf16.mxu0 0
        %892 = vmatpush1.bf16.xpose.msra.mxu0 0
        %893 = vmatprep.subr.bf16.mxu0 0
        %894 = vmatpush1.bf16.xpose.msra.mxu0 0
        %895 = vmatprep.mubr.bf16.mxu0 0
        %896 = vmatmul.mubr.bf16.gmra.mrb[0].mxu0 %v858
        %v897 = vpop.f32.mrb[0].mxu0
        %v898 = vadd.f32 %v738, %v897
        %v899 = vpop.f32.mrb[0].mxu0
        %v900 = vpop.f32.mrb[0].mxu0
        %v901 = vpop.f32.mrb[0].mxu0
        %902 = vdwg.mxu0
        %v903 = vsel %vm743, %v898, -inf
        %904 = vmax.xlane.f32.xlu0 %v903
        %v905 = vpop.xlane.xlu0 %904
        %v906 = vsub.f32 %v898, %v905
        %v907 = vmul.f32 %v906, 1.442695
        %v908 = vpow.pop %v907
        %v909 = vsel %vm743, %v908, 0.0
        %910 = vadd.xlane.f32.xlu0 %v909
        %v911 = vpop.xlane.xlu0 %910
        %v912 = vrcp.pop %v911
        %v913 = vmul.f32 %v908, %v912
        %v914 = vadd.f32 %v801, %v913
        %v915 = vpack.c.bf16 %v913, %v913
        %916 = vrot.lane.b32.xlu0 %v733, 56
        %v917 = vpop.permute.xlu0 %916
        %v919 = vsel %vm743, %v915, 0
        %v922 = vsel %vm808, %v917, 0
        %924 = vmatprep.subr.bf16.mxu0 0
        %925 = vmatpush1.bf16.msra.mxu0 %v922
        %926 = vmatprep.subr.bf16.mxu0 0
        %927 = vmatpush1.bf16.msra.mxu0 0
        %928 = vmatprep.subr.bf16.mxu0 0
        %929 = vmatpush1.bf16.msra.mxu0 0
        %930 = vmatprep.subr.bf16.mxu0 0
        %931 = vmatpush1.bf16.msra.mxu0 0
        %932 = vmatprep.subr.bf16.mxu0 0
        %933 = vmatpush1.bf16.msra.mxu0 0
        %934 = vmatprep.subr.bf16.mxu0 0
        %935 = vmatpush1.bf16.msra.mxu0 0
        %936 = vmatprep.subr.bf16.mxu0 0
        %937 = vmatpush1.bf16.msra.mxu0 0
        %938 = vmatprep.subr.bf16.mxu0 0
        %939 = vmatpush1.bf16.msra.mxu0 0
        %940 = vmatprep.subr.bf16.mxu0 0
        %941 = vmatpush1.bf16.msra.mxu0 0
        %942 = vmatprep.subr.bf16.mxu0 0
        %943 = vmatpush1.bf16.msra.mxu0 0
        %944 = vmatprep.subr.bf16.mxu0 0
        %945 = vmatpush1.bf16.msra.mxu0 0
        %946 = vmatprep.subr.bf16.mxu0 0
        %947 = vmatpush1.bf16.msra.mxu0 0
        %948 = vmatprep.subr.bf16.mxu0 0
        %949 = vmatpush1.bf16.msra.mxu0 0
        %950 = vmatprep.subr.bf16.mxu0 0
        %951 = vmatpush1.bf16.msra.mxu0 0
        %952 = vmatprep.subr.bf16.mxu0 0
        %953 = vmatpush1.bf16.msra.mxu0 0
        %954 = vmatprep.subr.bf16.mxu0 0
        %955 = vmatpush1.bf16.msra.mxu0 0
        %956 = vmatprep.mubr.bf16.mxu0 0
        %957 = vmatmul.mubr.bf16.gmra.mrb[0].mxu0 %v919
        %v958 = vpop.f32.mrb[0].mxu0
        %v959 = vadd.f32 0.0, %v958
        %v960 = vpop.f32.mrb[0].mxu0
        %v961 = vpop.f32.mrb[0].mxu0
        %v962 = vpop.f32.mrb[0].mxu0
        %963 = vdwg.mxu0
        %964 = vrot.lane.b32.xlu0 %v732, 112
        %v965 = vpop.permute.xlu0 %964
        %966 = vrot.lane.b32.xlu0 %v733, 80
        %v967 = vpop.permute.xlu0 %966
        %v969 = vsel %vm743, %v965, 0
        %v972 = vsel %vm743, %v967, 0
        %974 = vmatprep.subr.bf16.mxu0 0
        %975 = vmatpush1.bf16.xpose.msra.mxu0 %v972
        %976 = vmatprep.subr.bf16.mxu0 0
        %977 = vmatpush1.bf16.xpose.msra.mxu0 0
        %978 = vmatprep.subr.bf16.mxu0 0
        %979 = vmatpush1.bf16.xpose.msra.mxu0 0
        %980 = vmatprep.subr.bf16.mxu0 0
        %981 = vmatpush1.bf16.xpose.msra.mxu0 0
        %982 = vmatprep.subr.bf16.mxu0 0
        %983 = vmatpush1.bf16.xpose.msra.mxu0 0
        %984 = vmatprep.subr.bf16.mxu0 0
        %985 = vmatpush1.bf16.xpose.msra.mxu0 0
        %986 = vmatprep.subr.bf16.mxu0 0
        %987 = vmatpush1.bf16.xpose.msra.mxu0 0
        %988 = vmatprep.subr.bf16.mxu0 0
        %989 = vmatpush1.bf16.xpose.msra.mxu0 0
        %990 = vmatprep.subr.bf16.mxu0 0
        %991 = vmatpush1.bf16.xpose.msra.mxu0 0
        %992 = vmatprep.subr.bf16.mxu0 0
        %993 = vmatpush1.bf16.xpose.msra.mxu0 0
        %994 = vmatprep.subr.bf16.mxu0 0
        %995 = vmatpush1.bf16.xpose.msra.mxu0 0
        %996 = vmatprep.subr.bf16.mxu0 0
        %997 = vmatpush1.bf16.xpose.msra.mxu0 0
        %998 = vmatprep.subr.bf16.mxu0 0
        %999 = vmatpush1.bf16.xpose.msra.mxu0 0
        %1000 = vmatprep.subr.bf16.mxu0 0
        %1001 = vmatpush1.bf16.xpose.msra.mxu0 0
        %1002 = vmatprep.subr.bf16.mxu0 0
        %1003 = vmatpush1.bf16.xpose.msra.mxu0 0
        %1004 = vmatprep.subr.bf16.mxu0 0
        %1005 = vmatpush1.bf16.xpose.msra.mxu0 0
        %1006 = vmatprep.mubr.bf16.mxu0 0
        %1007 = vmatmul.mubr.bf16.gmra.mrb[0].mxu0 %v969
        %v1008 = vpop.f32.mrb[0].mxu0
        %v1009 = vadd.f32 %v738, %v1008
        %v1010 = vpop.f32.mrb[0].mxu0
        %v1011 = vpop.f32.mrb[0].mxu0
        %v1012 = vpop.f32.mrb[0].mxu0
        %1013 = vdwg.mxu0
        %v1014 = vsel %vm743, %v1009, -inf
        %1015 = vmax.xlane.f32.xlu0 %v1014
        %v1016 = vpop.xlane.xlu0 %1015
        %v1017 = vsub.f32 %v1009, %v1016
        %v1018 = vmul.f32 %v1017, 1.442695
        %v1019 = vpow.pop %v1018
        %v1020 = vsel %vm743, %v1019, 0.0
        %1021 = vadd.xlane.f32.xlu0 %v1020
        %v1022 = vpop.xlane.xlu0 %1021
        %v1023 = vrcp.pop %v1022
        %v1024 = vmul.f32 %v1019, %v1023
        %v1025 = vadd.f32 %v914, %v1024
        %v1026 = vpack.c.bf16 %v1024, %v1024
        %1027 = vrot.lane.b32.xlu0 %v733, 48
        %v1028 = vpop.permute.xlu0 %1027
        %v1030 = vsel %vm743, %v1026, 0
        %v1033 = vsel %vm808, %v1028, 0
        %1035 = vmatprep.subr.bf16.mxu0 0
        %1036 = vmatpush1.bf16.msra.mxu0 %v1033
        %1037 = vmatprep.subr.bf16.mxu0 0
        %1038 = vmatpush1.bf16.msra.mxu0 0
        %1039 = vmatprep.subr.bf16.mxu0 0
        %1040 = vmatpush1.bf16.msra.mxu0 0
        %1041 = vmatprep.subr.bf16.mxu0 0
        %1042 = vmatpush1.bf16.msra.mxu0 0
        %1043 = vmatprep.subr.bf16.mxu0 0
        %1044 = vmatpush1.bf16.msra.mxu0 0
        %1045 = vmatprep.subr.bf16.mxu0 0
        %1046 = vmatpush1.bf16.msra.mxu0 0
        %1047 = vmatprep.subr.bf16.mxu0 0
        %1048 = vmatpush1.bf16.msra.mxu0 0
        %1049 = vmatprep.subr.bf16.mxu0 0
        %1050 = vmatpush1.bf16.msra.mxu0 0
        %1051 = vmatprep.subr.bf16.mxu0 0
        %1052 = vmatpush1.bf16.msra.mxu0 0
        %1053 = vmatprep.subr.bf16.mxu0 0
        %1054 = vmatpush1.bf16.msra.mxu0 0
        %1055 = vmatprep.subr.bf16.mxu0 0
        %1056 = vmatpush1.bf16.msra.mxu0 0
        %1057 = vmatprep.subr.bf16.mxu0 0
        %1058 = vmatpush1.bf16.msra.mxu0 0
        %1059 = vmatprep.subr.bf16.mxu0 0
        %1060 = vmatpush1.bf16.msra.mxu0 0
        %1061 = vmatprep.subr.bf16.mxu0 0
        %1062 = vmatpush1.bf16.msra.mxu0 0
        %1063 = vmatprep.subr.bf16.mxu0 0
        %1064 = vmatpush1.bf16.msra.mxu0 0
        %1065 = vmatprep.subr.bf16.mxu0 0
        %1066 = vmatpush1.bf16.msra.mxu0 0
        %1067 = vmatprep.mubr.bf16.mxu0 0
        %1068 = vmatmul.mubr.bf16.gmra.mrb[0].mxu0 %v1030
        %v1069 = vpop.f32.mrb[0].mxu0
        %v1070 = vadd.f32 0.0, %v1069
        %v1071 = vpop.f32.mrb[0].mxu0
        %v1072 = vpop.f32.mrb[0].mxu0
        %v1073 = vpop.f32.mrb[0].mxu0
        %1074 = vdwg.mxu0
        %1075 = vrot.lane.b32.xlu0 %v732, 104
        %v1076 = vpop.permute.xlu0 %1075
        %1077 = vrot.lane.b32.xlu0 %v733, 72
        %v1078 = vpop.permute.xlu0 %1077
        %v1080 = vsel %vm743, %v1076, 0
        %v1083 = vsel %vm743, %v1078, 0
        %1085 = vmatprep.subr.bf16.mxu0 0
        %1086 = vmatpush1.bf16.xpose.msra.mxu0 %v1083
        %1087 = vmatprep.subr.bf16.mxu0 0
        %1088 = vmatpush1.bf16.xpose.msra.mxu0 0
        %1089 = vmatprep.subr.bf16.mxu0 0
        %1090 = vmatpush1.bf16.xpose.msra.mxu0 0
        %1091 = vmatprep.subr.bf16.mxu0 0
        %1092 = vmatpush1.bf16.xpose.msra.mxu0 0
        %1093 = vmatprep.subr.bf16.mxu0 0
        %1094 = vmatpush1.bf16.xpose.msra.mxu0 0
        %1095 = vmatprep.subr.bf16.mxu0 0
        %1096 = vmatpush1.bf16.xpose.msra.mxu0 0
        %1097 = vmatprep.subr.bf16.mxu0 0
        %1098 = vmatpush1.bf16.xpose.msra.mxu0 0
        %1099 = vmatprep.subr.bf16.mxu0 0
        %1100 = vmatpush1.bf16.xpose.msra.mxu0 0
        %1101 = vmatprep.subr.bf16.mxu0 0
        %1102 = vmatpush1.bf16.xpose.msra.mxu0 0
        %1103 = vmatprep.subr.bf16.mxu0 0
        %1104 = vmatpush1.bf16.xpose.msra.mxu0 0
        %1105 = vmatprep.subr.bf16.mxu0 0
        %1106 = vmatpush1.bf16.xpose.msra.mxu0 0
        %1107 = vmatprep.subr.bf16.mxu0 0
        %1108 = vmatpush1.bf16.xpose.msra.mxu0 0
        %1109 = vmatprep.subr.bf16.mxu0 0
        %1110 = vmatpush1.bf16.xpose.msra.mxu0 0
        %1111 = vmatprep.subr.bf16.mxu0 0
        %1112 = vmatpush1.bf16.xpose.msra.mxu0 0
        %1113 = vmatprep.subr.bf16.mxu0 0
        %1114 = vmatpush1.bf16.xpose.msra.mxu0 0
        %1115 = vmatprep.subr.bf16.mxu0 0
        %1116 = vmatpush1.bf16.xpose.msra.mxu0 0
        %1117 = vmatprep.mubr.bf16.mxu0 0
        %1118 = vmatmul.mubr.bf16.gmra.mrb[0].mxu0 %v1080
        %v1119 = vpop.f32.mrb[0].mxu0
        %v1120 = vadd.f32 %v738, %v1119
        %v1121 = vpop.f32.mrb[0].mxu0
        %v1122 = vpop.f32.mrb[0].mxu0
        %v1123 = vpop.f32.mrb[0].mxu0
        %1124 = vdwg.mxu0
        %v1125 = vsel %vm743, %v1120, -inf
        %1126 = vmax.xlane.f32.xlu0 %v1125
        %v1127 = vpop.xlane.xlu0 %1126
        %v1128 = vsub.f32 %v1120, %v1127
        %v1129 = vmul.f32 %v1128, 1.442695
        %v1130 = vpow.pop %v1129
        %v1131 = vsel %vm743, %v1130, 0.0
        %1132 = vadd.xlane.f32.xlu0 %v1131
        %v1133 = vpop.xlane.xlu0 %1132
        %v1134 = vrcp.pop %v1133
        %v1135 = vmul.f32 %v1130, %v1134
        %v1136 = vadd.f32 %v1025, %v1135
        %v1137 = vpack.c.bf16 %v1135, %v1135
        %1138 = vrot.lane.b32.xlu0 %v733, 40
        %v1139 = vpop.permute.xlu0 %1138
        %v1141 = vsel %vm743, %v1137, 0
        %v1144 = vsel %vm808, %v1139, 0
        %1146 = vmatprep.subr.bf16.mxu0 0
        %1147 = vmatpush1.bf16.msra.mxu0 %v1144
        %1148 = vmatprep.subr.bf16.mxu0 0
        %1149 = vmatpush1.bf16.msra.mxu0 0
        %1150 = vmatprep.subr.bf16.mxu0 0
        %1151 = vmatpush1.bf16.msra.mxu0 0
        %1152 = vmatprep.subr.bf16.mxu0 0
        %1153 = vmatpush1.bf16.msra.mxu0 0
        %1154 = vmatprep.subr.bf16.mxu0 0
        %1155 = vmatpush1.bf16.msra.mxu0 0
        %1156 = vmatprep.subr.bf16.mxu0 0
        %1157 = vmatpush1.bf16.msra.mxu0 0
        %1158 = vmatprep.subr.bf16.mxu0 0
        %1159 = vmatpush1.bf16.msra.mxu0 0
        %1160 = vmatprep.subr.bf16.mxu0 0
        %1161 = vmatpush1.bf16.msra.mxu0 0
        %1162 = vmatprep.subr.bf16.mxu0 0
        %1163 = vmatpush1.bf16.msra.mxu0 0
        %1164 = vmatprep.subr.bf16.mxu0 0
        %1165 = vmatpush1.bf16.msra.mxu0 0
        %1166 = vmatprep.subr.bf16.mxu0 0
        %1167 = vmatpush1.bf16.msra.mxu0 0
        %1168 = vmatprep.subr.bf16.mxu0 0
        %1169 = vmatpush1.bf16.msra.mxu0 0
        %1170 = vmatprep.subr.bf16.mxu0 0
        %1171 = vmatpush1.bf16.msra.mxu0 0
        %1172 = vmatprep.subr.bf16.mxu0 0
        %1173 = vmatpush1.bf16.msra.mxu0 0
        %1174 = vmatprep.subr.bf16.mxu0 0
        %1175 = vmatpush1.bf16.msra.mxu0 0
        %1176 = vmatprep.subr.bf16.mxu0 0
        %1177 = vmatpush1.bf16.msra.mxu0 0
        %1178 = vmatprep.mubr.bf16.mxu0 0
        %1179 = vmatmul.mubr.bf16.gmra.mrb[0].mxu0 %v1141
        %v1180 = vpop.f32.mrb[0].mxu0
        %v1181 = vadd.f32 0.0, %v1180
        %v1182 = vpop.f32.mrb[0].mxu0
        %v1183 = vpop.f32.mrb[0].mxu0
        %v1184 = vpop.f32.mrb[0].mxu0
        %1185 = vdwg.mxu0
        %1187 = vrot.lane.b32.xlu0 %v959, 8
        %v1188 = vpop.permute.xlu0 %1187
        %1191 = vrot.lane.b32.xlu0 %v1070, 16
        %v1192 = vpop.permute.xlu0 %1191
        %1195 = vrot.lane.b32.xlu0 %v1181, 24
        %v1196 = vpop.permute.xlu0 %1195
        %v1198 = vsel %vm743, %v847, %v1188
        %vm1199 = vcmask 130048
        %v1200 = vsel %vm1199, %v1198, %v1192
        %vm1201 = vcmask 195584
        %v1202 = vsel %vm1201, %v1200, %v1196
        %v1203 = vpack.c.bf16 %v1202, %v1202
        %v1204 = vld [vmem:[#allocation5] sm:$0xf]
        %v1205 = vld [vmem:[#allocation5 + $0x4] sm:$0xf]
        %v1206 = vld [vmem:[#allocation5 + $0x8] sm:$0xf]
        %v1207 = vld [vmem:[#allocation5 + $0xc] sm:$0xf]
        %v1208 = vld [vmem:[#allocation7] sm:$0x1]
        %v1210 = vlaneseq
        %v1211 = vshrl.u32 %v1210, 7
        %v1212 = vsub.s32 0, %v1211
        %v1213 = vrot.slane %v1208, %v1212
        %v1219 = vunpack.c.l.b16 %v1204
        %v1220 = vunpack.c.l.b16 %v1205
        %v1221 = vunpack.c.l.b16 %v1206
        %v1222 = vunpack.c.l.b16 %v1207
        %v1223 = vpack.c.b16 %v1220, %v1219
        %v1224 = vpack.c.b16 %v1222, %v1221
        %v1228 = vsel %vm685, %v1203, 0
        %1230 = vmatprep.subr.bf16.mxu0 0
        %1231 = vmatpush1.bf16.msra.mxu0 %v1223
        %1232 = vmatprep.subr.bf16.mxu0 0
        %1233 = vmatpush1.bf16.msra.mxu0 %v1224
        %1234 = vmatprep.subr.bf16.mxu0 0
        %1235 = vmatpush1.bf16.msra.mxu0 0
        %1236 = vmatprep.subr.bf16.mxu0 0
        %1237 = vmatpush1.bf16.msra.mxu0 0
        %1238 = vmatprep.subr.bf16.mxu0 0
        %1239 = vmatpush1.bf16.msra.mxu0 0
        %1240 = vmatprep.subr.bf16.mxu0 0
        %1241 = vmatpush1.bf16.msra.mxu0 0
        %1242 = vmatprep.subr.bf16.mxu0 0
        %1243 = vmatpush1.bf16.msra.mxu0 0
        %1244 = vmatprep.subr.bf16.mxu0 0
        %1245 = vmatpush1.bf16.msra.mxu0 0
        %1246 = vmatprep.subr.bf16.mxu0 0
        %1247 = vmatpush1.bf16.msra.mxu0 0
        %1248 = vmatprep.subr.bf16.mxu0 0
        %1249 = vmatpush1.bf16.msra.mxu0 0
        %1250 = vmatprep.subr.bf16.mxu0 0
        %1251 = vmatpush1.bf16.msra.mxu0 0
        %1252 = vmatprep.subr.bf16.mxu0 0
        %1253 = vmatpush1.bf16.msra.mxu0 0
        %1254 = vmatprep.subr.bf16.mxu0 0
        %1255 = vmatpush1.bf16.msra.mxu0 0
        %1256 = vmatprep.subr.bf16.mxu0 0
        %1257 = vmatpush1.bf16.msra.mxu0 0
        %1258 = vmatprep.subr.bf16.mxu0 0
        %1259 = vmatpush1.bf16.msra.mxu0 0
        %1260 = vmatprep.subr.bf16.mxu0 0
        %1261 = vmatpush1.bf16.msra.mxu0 0
        %1262 = vmatprep.mubr.bf16.mxu0 0
        %1263 = vmatmul.mubr.bf16.gmra.mrb[0].mxu0 %v1228
        %v1264 = vpop.f32.mrb[0].mxu0
        %v1265 = vadd.f32 %v1213, %v1264
        %v1266 = vpop.f32.mrb[0].mxu0
        %v1267 = vpop.f32.mrb[0].mxu0
        %v1268 = vpop.f32.mrb[0].mxu0
        %1269 = vdwg.mxu0
        %v1270 = vadd.f32 %v660, %v1265
        %v1271 = vsel %vm685, %v1270, 0.0
        %1272 = vadd.xlane.f32.xlu0 %v1271
        %v1273 = vpop.xlane.xlu0 %1272
        %v1274 = vrcp.pop 32.0
        %v1275 = vmul.f32 %v1273, %v1274
        %v1276 = vsub.f32 %v1270, %v1275
        %v1277 = vmul.f32 %v1276, %v1276
        %v1278 = vsel %vm685, %v1277, 0.0
        %1279 = vadd.xlane.f32.xlu0 %v1278
        %v1280 = vpop.xlane.xlu0 %1279
        %v1281 = vmul.f32 %v1280, %v1274
        %v1282 = vadd.f32 %v1281, 1e-05
        %v1283 = vrsqrt.pop %v1282
        %v1284 = vmul.f32 %v1276, %v1283
        %v1285 = vld [vmem:[#allocation8] sm:$0x1]
        %v1287 = vlaneseq
        %v1288 = vshrl.u32 %v1287, 7
        %v1289 = vsub.s32 0, %v1288
        %v1290 = vrot.slane %v1285, %v1289
        %v1292 = vmul.f32 %v1284, %v1290
        %v1293 = vld [vmem:[#allocation10] sm:$0x1]
        %v1295 = vlaneseq
        %v1296 = vshrl.u32 %v1295, 7
        %v1297 = vsub.s32 0, %v1296
        %v1298 = vrot.slane %v1293, %v1297
        %v1300 = vadd.f32 %v1292, %v1298
        %v1301 = vpack.c.bf16 %v1300, %v1300
        %v1302 = vld [vmem:[%s9] sm:$0xf]
        %v1303 = vld [vmem:[%s9 + $0x4] sm:$0xf]
        %v1304 = vld [vmem:[%s9 + $0x8] sm:$0xf]
        %v1305 = vld [vmem:[%s9 + $0xc] sm:$0xf]
        %v1306 = vld [vmem:[%s10] sm:$0x1]
        %v1308 = vlaneseq
        %v1309 = vshrl.u32 %v1308, 7
        %v1310 = vsub.s32 0, %v1309
        %v1311 = vrot.slane %v1306, %v1310
        %v1317 = vunpack.c.l.b16 %v1302
        %v1318 = vunpack.c.l.b16 %v1303
        %v1319 = vunpack.c.l.b16 %v1304
        %v1320 = vunpack.c.l.b16 %v1305
        %v1321 = vpack.c.b16 %v1318, %v1317
        %v1322 = vpack.c.b16 %v1320, %v1319
        %v1326 = vsel %vm685, %v1301, 0
        %1328 = vmatprep.subr.bf16.mxu0 0
        %1329 = vmatpush1.bf16.msra.mxu0 %v1321
        %1330 = vmatprep.subr.bf16.mxu0 0
        %1331 = vmatpush1.bf16.msra.mxu0 %v1322
        %1332 = vmatprep.subr.bf16.mxu0 0
        %1333 = vmatpush1.bf16.msra.mxu0 0
        %1334 = vmatprep.subr.bf16.mxu0 0
        %1335 = vmatpush1.bf16.msra.mxu0 0
        %1336 = vmatprep.subr.bf16.mxu0 0
        %1337 = vmatpush1.bf16.msra.mxu0 0
        %1338 = vmatprep.subr.bf16.mxu0 0
        %1339 = vmatpush1.bf16.msra.mxu0 0
        %1340 = vmatprep.subr.bf16.mxu0 0
        %1341 = vmatpush1.bf16.msra.mxu0 0
        %1342 = vmatprep.subr.bf16.mxu0 0
        %1343 = vmatpush1.bf16.msra.mxu0 0
        %1344 = vmatprep.subr.bf16.mxu0 0
        %1345 = vmatpush1.bf16.msra.mxu0 0
        %1346 = vmatprep.subr.bf16.mxu0 0
        %1347 = vmatpush1.bf16.msra.mxu0 0
        %1348 = vmatprep.subr.bf16.mxu0 0
        %1349 = vmatpush1.bf16.msra.mxu0 0
        %1350 = vmatprep.subr.bf16.mxu0 0
        %1351 = vmatpush1.bf16.msra.mxu0 0
        %1352 = vmatprep.subr.bf16.mxu0 0
        %1353 = vmatpush1.bf16.msra.mxu0 0
        %1354 = vmatprep.subr.bf16.mxu0 0
        %1355 = vmatpush1.bf16.msra.mxu0 0
        %1356 = vmatprep.subr.bf16.mxu0 0
        %1357 = vmatpush1.bf16.msra.mxu0 0
        %1358 = vmatprep.subr.bf16.mxu0 0
        %1359 = vmatpush1.bf16.msra.mxu0 0
        %1360 = vmatprep.mubr.bf16.mxu0 0
        %1361 = vmatmul.mubr.bf16.gmra.mrb[0].mxu0 %v1326
        %v1362 = vpop.f32.mrb[0].mxu0
        %v1363 = vadd.f32 %v1311, %v1362
        %v1364 = vpop.f32.mrb[0].mxu0
        %v1365 = vpop.f32.mrb[0].mxu0
        %v1366 = vpop.f32.mrb[0].mxu0
        %1367 = vdwg.mxu0
        %v1368 = vmax.f32 %v1363, 0.0
        %v1369 = vpack.c.bf16 %v1368, %v1368
        %v1370 = vld [vmem:[%s11] sm:$0xf]
        %v1371 = vld [vmem:[%s11 + $0x4] sm:$0xf]
        %v1372 = vld [vmem:[%s11 + $0x8] sm:$0xf]
        %v1373 = vld [vmem:[%s11 + $0xc] sm:$0xf]
        %v1374 = vld [vmem:[%s11 + $0x10] sm:$0xf]
        %v1375 = vld [vmem:[%s11 + $0x14] sm:$0xf]
        %v1376 = vld [vmem:[%s11 + $0x18] sm:$0xf]
        %v1377 = vld [vmem:[%s11 + $0x1c] sm:$0xf]
        %v1378 = vld [vmem:[%s12] sm:$0x1]
        %v1380 = vlaneseq
        %v1381 = vshrl.u32 %v1380, 7
        %v1382 = vsub.s32 0, %v1381
        %v1383 = vrot.slane %v1378, %v1382
        %v1393 = vunpack.c.l.b16 %v1370
        %v1394 = vunpack.c.l.b16 %v1371
        %v1395 = vunpack.c.l.b16 %v1372
        %v1396 = vunpack.c.l.b16 %v1373
        %v1397 = vunpack.c.l.b16 %v1374
        %v1398 = vunpack.c.l.b16 %v1375
        %v1399 = vunpack.c.l.b16 %v1376
        %v1400 = vunpack.c.l.b16 %v1377
        %v1401 = vpack.c.b16 %v1394, %v1393
        %v1402 = vpack.c.b16 %v1396, %v1395
        %v1403 = vpack.c.b16 %v1398, %v1397
        %v1404 = vpack.c.b16 %v1400, %v1399
        %vm1409 = vcmask 523264
        %v1411 = vsel %vm1409, %v1369, 0
        %1413 = vmatprep.subr.bf16.mxu0 0
        %1414 = vmatpush1.bf16.msra.mxu0 %v1401
        %1415 = vmatprep.subr.bf16.mxu0 0
        %1416 = vmatpush1.bf16.msra.mxu0 %v1402
        %1417 = vmatprep.subr.bf16.mxu0 0
        %1418 = vmatpush1.bf16.msra.mxu0 %v1403
        %1419 = vmatprep.subr.bf16.mxu0 0
        %1420 = vmatpush1.bf16.msra.mxu0 %v1404
        %1421 = vmatprep.subr.bf16.mxu0 0
        %1422 = vmatpush1.bf16.msra.mxu0 0
        %1423 = vmatprep.subr.bf16.mxu0 0
        %1424 = vmatpush1.bf16.msra.mxu0 0
        %1425 = vmatprep.subr.bf16.mxu0 0
        %1426 = vmatpush1.bf16.msra.mxu0 0
        %1427 = vmatprep.subr.bf16.mxu0 0
        %1428 = vmatpush1.bf16.msra.mxu0 0
        %1429 = vmatprep.subr.bf16.mxu0 0
        %1430 = vmatpush1.bf16.msra.mxu0 0
        %1431 = vmatprep.subr.bf16.mxu0 0
        %1432 = vmatpush1.bf16.msra.mxu0 0
        %1433 = vmatprep.subr.bf16.mxu0 0
        %1434 = vmatpush1.bf16.msra.mxu0 0
        %1435 = vmatprep.subr.bf16.mxu0 0
        %1436 = vmatpush1.bf16.msra.mxu0 0
        %1437 = vmatprep.subr.bf16.mxu0 0
        %1438 = vmatpush1.bf16.msra.mxu0 0
        %1439 = vmatprep.subr.bf16.mxu0 0
        %1440 = vmatpush1.bf16.msra.mxu0 0
        %1441 = vmatprep.subr.bf16.mxu0 0
        %1442 = vmatpush1.bf16.msra.mxu0 0
        %1443 = vmatprep.subr.bf16.mxu0 0
        %1444 = vmatpush1.bf16.msra.mxu0 0
        %1445 = vmatprep.mubr.bf16.mxu0 0
        %1446 = vmatmul.mubr.bf16.gmra.mrb[0].mxu0 %v1411
        %v1447 = vpop.f32.mrb[0].mxu0
        %v1448 = vadd.f32 %v1383, %v1447
        %v1449 = vpop.f32.mrb[0].mxu0
        %v1450 = vpop.f32.mrb[0].mxu0
        %v1451 = vpop.f32.mrb[0].mxu0
        %1452 = vdwg.mxu0
        %v1453 = vadd.f32 %v1300, %v1448
        %v1454 = vsel %vm685, %v1453, 0.0
        %1455 = vadd.xlane.f32.xlu0 %v1454
        %v1456 = vpop.xlane.xlu0 %1455
        %v1457 = vmul.f32 %v1456, %v1274
        %v1458 = vsub.f32 %v1453, %v1457
        %v1459 = vmul.f32 %v1458, %v1458
        %v1460 = vsel %vm685, %v1459, 0.0
        %1461 = vadd.xlane.f32.xlu0 %v1460
        %v1462 = vpop.xlane.xlu0 %1461
        %v1463 = vmul.f32 %v1462, %v1274
        %v1464 = vadd.f32 %v1463, 1e-05
        %v1465 = vrsqrt.pop %v1464
        %v1466 = vmul.f32 %v1458, %v1465
        %v1467 = vld [vmem:[%s13] sm:$0x1]
        %v1469 = vlaneseq
        %v1470 = vshrl.u32 %v1469, 7
        %v1471 = vsub.s32 0, %v1470
        %v1472 = vrot.slane %v1467, %v1471
        %v1474 = vmul.f32 %v1466, %v1472
        %v1475 = vld [vmem:[%s14] sm:$0x1]
        %v1477 = vlaneseq
        %v1478 = vshrl.u32 %v1477, 7
        %v1479 = vsub.s32 0, %v1478
        %v1480 = vrot.slane %v1475, %v1479
        %v1482 = vadd.f32 %v1474, %v1480
        %1483 = vst.msk [vmem:[%s632] sm:$0xff] %vm685, %v1482
        %v1484 = vmul.f32 %v1136, 0.25
        %1485 = vst.msk [vmem:[%s639] sm:$0xff] %vm743, %v1484
        %v1486 = vld [vmem:[%s655] sm:$0xff]
        %v1487 = vmul.f32 %v1484, %v1486
        %v1488 = vsel %vm743, %v1487, 0.0
        %1489 = vadd.xlane.f32.xlu0 %v1488
        %v1490 = vpop.xlane.xlu0 %1489
        %v1491 = vrot.slane %v1490, 4
        %v1492 = vadd.f32 %v1490, %v1491
        %v1493 = vrot.slane %v1492, 2
        %v1494 = vadd.f32 %v1492, %v1493
        %v1495 = vrot.slane %v1494, 1
        %v1496 = vadd.f32 %v1494, %v1495
        %s1497 = vtos %v1496
        %v1498 = vstv %s1497
        %vm1499 = vcmask 0
        %1500 = vst.msk [vmem:[%s658] sm:$0x1] %vm1499, %v1498
        %s1501 = sand.u32 %s376, 1
        %s1502 = scalar_lea.sflag [#allocation4], %s1501
        %s1503 = sand.u32 %s376, 1
        %s1504 = smul.addr %s1503, 8
        %s1505 = scalar_lea.vmem [#allocation11], %s1504
        %s1506 = sand.u32 %s402, 1
        %s1507 = scalar_lea.sflag [#allocation13], %s1506
        %s1508 = sand.u32 %s402, 1
        %s1509 = smul.addr %s1508, 8
        %s1510 = scalar_lea.vmem [#allocation12], %s1509
        %p1511 = scmp.lt.s32.totalorder %s38, 1
        %s1512 = scalar_select %p1511, %s38, 1
        %s1513 = scalar_lea.vmem %s17, %s1512
        // Predicated region
        $region101: #{tpu_custom_call.1} parent=79 // pred_check
          %p1514 = pneg %p386
        $region102: #{tpu_custom_call.1} parent=79 // pred_check_branch
          %1516 = sbr.rel (%p1514) target = $region104
        $region103: #{tpu_custom_call.1} parent=79 // pred_region
          %s1518 = ssub.s32 128, 128
          %1519 = vsyncadd %s1502, %s1518
          %s1520 = smul.addr %s38, 128
          %s1521 = scalar_lea.hbm %s15, %s1520
          %s1523 = sshll.u32 %s1505, 4
          %s1524 = int_to_ptr.vmem [resolvable:$true] %s1523
          %1526 = dma.vmem_to_hbm [thread:$0]  %s1524, 128, %s1521, %s1502
        $region104: #{tpu_custom_call.1} parent=79 // pred_fallthru
          _
        // Predicated region
        $region105: #{tpu_custom_call.1} parent=79 // pred_check
          %p1527 = pneg %p412
        $region106: #{tpu_custom_call.1} parent=79 // pred_check_branch
          %1529 = sbr.rel (%p1527) target = $region108
        $region107: #{tpu_custom_call.1} parent=79 // pred_region
          %s1531 = ssub.s32 128, 128
          %1532 = vsyncadd %s1507, %s1531
          %s1533 = smul.addr %s38, 128
          %s1534 = scalar_lea.hbm %s16, %s1533
          %s1536 = sshll.u32 %s1510, 4
          %s1537 = int_to_ptr.vmem [resolvable:$true] %s1536
          %1539 = dma.vmem_to_hbm [thread:$0]  %s1537, 128, %s1534, %s1507
        $region108: #{tpu_custom_call.1} parent=79 // pred_fallthru
          _
        // Predicated region
        $region109: #{tpu_custom_call.1} parent=79 // pred_check
          %p1540 = pneg %p438
        $region110: #{tpu_custom_call.1} parent=79 // pred_check_branch
          %1542 = sbr.rel (%p1540) target = $region112
        $region111: #{tpu_custom_call.1} parent=79 // pred_region
          _
        $region112: #{tpu_custom_call.1} parent=79 // pred_fallthru
          _
      $region80: #{tpu_custom_call.1} parent=5 // pred_fallthru
        _
      %p1543 = scmp.le.s32.totalorder 2, %s33
      // Predicated region
      $region113: #{tpu_custom_call.1} parent=5 // pred_check
        %p1544 = pneg %p1543
      $region114: #{tpu_custom_call.1} parent=5 // pred_check_branch
        %1546 = sbr.rel (%p1544) target = $region116
      $region115: #{tpu_custom_call.1} parent=5 // pred_region
        %s1547 = ssub.s32 %s33, 2
        // Predicated region
        $region117: #{tpu_custom_call.1} parent=115 // pred_check
          %p1548 = pneg %p392
        $region118: #{tpu_custom_call.1} parent=115 // pred_check_branch
          %1550 = sbr.rel (%p1548) target = $region120
        $region119: #{tpu_custom_call.1} parent=115 // pred_region
          %s1551 = sand.u32 %s377, 1
          %s1552 = scalar_lea.sflag [#allocation4], %s1551
          %s1553 = sand.u32 %s377, 1
          %s1554 = smul.addr %s1553, 8
          %s1555 = scalar_lea.vmem [#allocation11], %s1554
          %1556 = dma.done %s1552, 128
        $region120: #{tpu_custom_call.1} parent=115 // pred_fallthru
          _
        // Predicated region
        $region121: #{tpu_custom_call.1} parent=115 // pred_check
          %p1557 = pneg %p418
        $region122: #{tpu_custom_call.1} parent=115 // pred_check_branch
          %1559 = sbr.rel (%p1557) target = $region124
        $region123: #{tpu_custom_call.1} parent=115 // pred_region
          %s1560 = sand.u32 %s403, 1
          %s1561 = scalar_lea.sflag [#allocation13], %s1560
          %s1562 = sand.u32 %s403, 1
          %s1563 = smul.addr %s1562, 8
          %s1564 = scalar_lea.vmem [#allocation12], %s1563
          %1565 = dma.done %s1561, 128
        $region124: #{tpu_custom_call.1} parent=115 // pred_fallthru
          _
        // Predicated region
        $region125: #{tpu_custom_call.1} parent=115 // pred_check
          %p1566 = pneg %p444
        $region126: #{tpu_custom_call.1} parent=115 // pred_check_branch
          %1568 = sbr.rel (%p1566) target = $region128
        $region127: #{tpu_custom_call.1} parent=115 // pred_region
          %p1569 = scmp.lt.s32.totalorder %s39, 1
          %s1570 = scalar_select %p1569, %s39, 1
          %s1571 = scalar_lea.vmem %s17, %s1570
        $region128: #{tpu_custom_call.1} parent=115 // pred_fallthru
          _
      $region116: #{tpu_custom_call.1} parent=5 // pred_fallthru
        _
    $region6: #{tpu_custom_call.1} parent=1 // loop_footer
      %s37 = sadd.s32 1, %s33
    $region7: #{tpu_custom_call.1} parent=1 // loop_footer_branch
      %32 = sbr.rel target = $region3
    $region8: #{tpu_custom_call.1} parent=1 // loop_exit
      _
    %1572 = vsyncpa [#allocation3], 1
    %s1573 = scalar_lea.sflag [#allocation3], 1
    %1574 = vsyncpa %s1573, 1
    %1575 = vsyncpa [#allocation6], 1
    %1576 = vsyncpa [#allocation9], 1
    %1577 = vsyncpa [#allocation4], 1
    %s1578 = scalar_lea.sflag [#allocation4], 1
    %1579 = vsyncpa %s1578, 1
    %1580 = vsyncpa [#allocation13], 1
    %s1581 = scalar_lea.sflag [#allocation13], 1
    %1582 = vsyncpa %s1581, 1

</llo_original>
